<compile_context>
chip_gen: v6e
topology: v6e:2x2x1
jax: 0.10.0
libtpu: 0.0.40
codegen_flags: <defaults>
</compile_context>

<pallas_src>
import jax
import jax.numpy as jnp
import numpy as np
from jax import lax
from jax.experimental import pallas as pl
from jax.experimental.pallas import tpu as pltpu


def _encoder2_kernel(x_ref, wxin_ref, wrec_ref, bias_ref,
                     h_out_ref, c_out_ref, xproj_scr):
    """Fused, skewed 2-layer LSTM over the whole sequence in one invocation."""
    B, S, I = x_ref.shape
    H = h_out_ref.shape[2]
    H8 = 8 * H

    # ---- hoisted layer-1 input projection for all time steps (off the serial path) ----
    # Matmul directly on batch_first rows (no lane-sparse pre-transpose); permute the
    # lane-dense (…, 8H) result to time-major once after the matmul.
    xproj = jnp.dot(x_ref[...].reshape(B * S, I), wxin_ref[...],
                    preferred_element_type=jnp.float32)              # (B*S, 8H)
    xproj = xproj + bias_ref[...]                                     # b1 in L1 slots, b2 in L2 slots
    xproj_scr[...] = jnp.transpose(xproj.reshape(B, S, H8), (1, 0, 2))

    # Loop invariants hoisted (kept vreg-resident across the unrolled loop).
    w_rec = wrec_ref[...]                                             # (2H, 8H)
    bias = bias_ref[...]                                              # (1, 8H)

    def gate_split(sig):
        # Interleaved gate layout: [i1 i2 | f1 f2 | g1 g2 | o1 o2], each block H wide.
        i_g = sig[:, 0 * H:2 * H]
        f_g = sig[:, 2 * H:4 * H]
        g_g = 2.0 * sig[:, 4 * H:6 * H] - 1.0    # tanh(x) = 2*sigmoid(2x)-1; g cols pre-scaled by 2
        o_g = sig[:, 6 * H:8 * H]
        return i_g, f_g, g_g, o_g

    # ---- prologue: layer-1 step 0 (zero initial state -> no recurrent matmul) ----
    i0, f0, g0, o0 = gate_split(jax.nn.sigmoid(xproj_scr[0]))
    c0 = i0 * g0
    h0 = o0 * jnp.tanh(c0)
    lane = lax.broadcasted_iota(jnp.int32, (B, 2 * H), 1)
    keep1 = lane < H                               # keep layer-1 half; layer-2 state starts at 0
    hcat = jnp.where(keep1, h0, 0.0)               # [h1_0 | h2_{-1}=0]
    ccat = jnp.where(keep1, c0, 0.0)               # [c1_0 | c2_{-1}=0]

    # ---- skewed main loop: iteration t = layer-2 step t + layer-1 step t+1,
    #      with ONE fused matmul and ONE full-width sigmoid on the serial path ----
    def step(t, carry):
        hcat, ccat = carry                          # [h1_t | h2_{t-1}], [c1_t | c2_{t-1}]
        gates = jnp.dot(hcat, w_rec,
                        preferred_element_type=jnp.float32) + xproj_scr[t + 1]
        i_g, f_g, g_g, o_g = gate_split(jax.nn.sigmoid(gates))
        ccat = f_g * ccat + i_g * g_g               # [c1_{t+1} | c2_t]
        hcat = o_g * jnp.tanh(ccat)                 # [h1_{t+1} | h2_t]
        return hcat, ccat

    n_iters = S - 1
    hcat, ccat = lax.fori_loop(0, n_iters, step, (hcat, ccat),
                               unroll=True if n_iters <= 16 else 8)
    # hcat = [h1_{S-1} | h2_{S-2}], ccat = [c1_{S-1} | c2_{S-2}]

    # ---- epilogue: layer-2 step S-1 (the layer-1 half of this pass is discarded) ----
    gates = jnp.dot(hcat, w_rec, preferred_element_type=jnp.float32) + bias
    i_g, f_g, g_g, o_g = gate_split(jax.nn.sigmoid(gates))
    ccat_f = f_g * ccat + i_g * g_g
    hcat_f = o_g * jnp.tanh(ccat_f)

    # Final states only (the Encoder discards the full output sequence).
    h_out_ref[0] = hcat[:, 0:H].astype(h_out_ref.dtype)            # h1_{S-1}
    c_out_ref[0] = ccat[:, 0:H].astype(c_out_ref.dtype)            # c1_{S-1}
    h_out_ref[1] = hcat_f[:, H:2 * H].astype(h_out_ref.dtype)      # h2_{S-1}
    c_out_ref[1] = ccat_f[:, H:2 * H].astype(c_out_ref.dtype)      # c2_{S-1}


def _interleave_gates(m1, m2, H):
    """(K,4H) layer-1-slot + (K,4H) layer-2-slot gates -> (K,8H) [i1 i2 f1 f2 g1 g2 o1 o2]."""
    K = m1.shape[0]
    return jnp.stack([m1.reshape(K, 4, H), m2.reshape(K, 4, H)], axis=2).reshape(K, 8 * H)


@jax.jit
def encoder_forward(x_bsi, params):
    """Encoder.forward: x (B, S, I) batch_first -> (hidden, cell), each (2, B, H)."""
    (w1_ih, w1_hh, b1_ih, b1_hh), (w2_ih, w2_hh, b2_ih, b2_hh) = params
    B, S, I = x_bsi.shape
    H = w1_hh.shape[1]
    f32 = jnp.float32

    # Pre-scale the g-gate columns by 2 so tanh can be recovered from the full-tile sigmoid.
    gscale = jnp.concatenate([jnp.ones((2 * H,), f32),
                              jnp.full((H,), 2.0, f32),
                              jnp.ones((H,), f32)])

    w1ih_t = w1_ih.T.astype(f32) * gscale                              # (I, 4H)
    w1hh_t = w1_hh.T.astype(f32) * gscale                              # (H, 4H)
    w2ih_t = w2_ih.T.astype(f32) * gscale                              # (H, 4H)
    w2hh_t = w2_hh.T.astype(f32) * gscale                              # (H, 4H)
    b1 = ((b1_ih + b1_hh).astype(f32) * gscale).reshape(1, 4 * H)
    b2 = ((b2_ih + b2_hh).astype(f32) * gscale).reshape(1, 4 * H)

    # Fused recurrent block weight (2H, 8H): LHS rows = [h1_t | h2_{t-1}];
    # layer-1 columns -> layer-1 gates at t+1, layer-2 columns -> layer-2 gates at t.
    zeros_h = jnp.zeros((H, 4 * H), f32)
    w_rec = jnp.concatenate([_interleave_gates(w1hh_t, w2ih_t, H),
                             _interleave_gates(zeros_h, w2hh_t, H)], axis=0)   # (2H, 8H)

    # Layer-1 input-projection weight padded into the interleaved 8H layout
    # (layer-2 slots zero) and the combined bias row (b1 | b2 interleaved).
    w_xin = _interleave_gates(w1ih_t, jnp.zeros((I, 4 * H), f32), H)           # (I, 8H)
    bias = _interleave_gates(b1, b2, H)                                        # (1, 8H)

    vmem = pl.BlockSpec(memory_space=pltpu.MemorySpace.VMEM)
    h, c = pl.pallas_call(
        _encoder2_kernel,
        out_shape=(jax.ShapeDtypeStruct((2, B, H), f32),
                   jax.ShapeDtypeStruct((2, B, H), f32)),
        in_specs=[vmem, vmem, vmem, vmem],
        out_specs=(vmem, vmem),
        scratch_shapes=[pltpu.VMEM((S, B, 8 * H), f32)],   # time-major input projection (+bias)
    )(x_bsi.astype(f32), w_xin, w_rec, bias)
    return h, c


def encoder_reference(x_bsi, params):
    """Pure-JAX reference of nn.LSTM (eval mode) for verification."""
    B, S, _ = x_bsi.shape
    layer_in = x_bsi.astype(jnp.float32)
    hs, cs = [], []
    for (w_ih, w_hh, b_ih, b_hh) in params:
        H = w_hh.shape[1]
        h = jnp.zeros((B, H), jnp.float32)
        c = jnp.zeros((B, H), jnp.float32)
        outs = []
        for t in range(S):
            g = layer_in[:, t] @ w_ih.T + b_ih + h @ w_hh.T + b_hh
            i_g = jax.nn.sigmoid(g[:, :H])
            f_g = jax.nn.sigmoid(g[:, H:2 * H])
            g_g = jnp.tanh(g[:, 2 * H:3 * H])
            o_g = jax.nn.sigmoid(g[:, 3 * H:])
            c = f_g * c + i_g * g_g
            h = o_g * jnp.tanh(c)
            outs.append(h)
        layer_in = jnp.stack(outs, axis=1)
        hs.append(h)
        cs.append(c)
    return jnp.stack(hs, axis=0), jnp.stack(cs, axis=0)


def init_lstm_params(key, input_size, hidden_size, n_layers):
    """Deterministic init matching nn.LSTM parameter shapes (uniform(-k, k), k=1/sqrt(H))."""
    k = 1.0 / np.sqrt(hidden_size)
    params = []
    for layer in range(n_layers):
        in_sz = input_size if layer == 0 else hidden_size
        key, k1, k2, k3, k4 = jax.random.split(key, 5)
        w_ih = jax.random.uniform(k1, (4 * hidden_size, in_sz), jnp.float32, -k, k)
        w_hh = jax.random.uniform(k2, (4 * hidden_size, hidden_size), jnp.float32, -k, k)
        b_ih = jax.random.uniform(k3, (4 * hidden_size,), jnp.float32, -k, k)
        b_hh = jax.random.uniform(k4, (4 * hidden_size,), jnp.float32, -k, k)
        params.append((w_ih, w_hh, b_ih, b_hh))
    return params


if __name__ == "__main__":
    # Small shapes consistent with the module (batch_first input [B, S, input_size]).
    B, S, INPUT, HIDDEN, NLAYERS = 8, 8, 16, 32, 2

    key = jax.random.PRNGKey(0)
    key, xk = jax.random.split(key)
    x = jax.random.normal(xk, (B, S, INPUT), jnp.float32)

    params = init_lstm_params(key, INPUT, HIDDEN, NLAYERS)

    hidden, cell = encoder_forward(x, params)
    hidden, cell = jax.block_until_ready((hidden, cell))

    h_ref, c_ref = encoder_reference(x, params)
    assert hidden.shape == (NLAYERS, B, HIDDEN) and cell.shape == (NLAYERS, B, HIDDEN)
    np.testing.assert_allclose(np.asarray(hidden), np.asarray(h_ref), rtol=1e-5, atol=1e-5)
    np.testing.assert_allclose(np.asarray(cell), np.asarray(c_ref), rtol=1e-5, atol=1e-5)

    print("KERNEL_OK")
</pallas_src>

<mosaic_0001>
module attributes {stable_mosaic.version = 11 : i64} {
  func.func @_encoder2_kernel(%arg0: memref<8x8x16xf32, #tpu.memory_space<vmem>>, %arg1: memref<16x256xf32, #tpu.memory_space<vmem>>, %arg2: memref<64x256xf32, #tpu.memory_space<vmem>>, %arg3: memref<1x256xf32, #tpu.memory_space<vmem>>, %arg4: memref<2x8x32xf32, #tpu.memory_space<vmem>>, %arg5: memref<2x8x32xf32, #tpu.memory_space<vmem>>, %arg6: memref<8x8x256xf32, #tpu.memory_space<vmem>>) attributes {dimension_semantics = [], scalar_prefetch = 0 : i64, scratch_operands = 1 : i64, tpu.core_type = #tpu.core_type<tc>} {
    %c0 = arith.constant 0 : index
    %c0_0 = arith.constant 0 : index
    %c0_1 = arith.constant 0 : index
    %0 = vector.load %arg0[%c0, %c0_0, %c0_1] : memref<8x8x16xf32, #tpu.memory_space<vmem>>, vector<8x8x16xf32>
    %1 = vector.shape_cast %0 : vector<8x8x16xf32> to vector<64x16xf32>
    %c0_2 = arith.constant 0 : index
    %c0_3 = arith.constant 0 : index
    %2 = vector.load %arg1[%c0_2, %c0_3] : memref<16x256xf32, #tpu.memory_space<vmem>>, vector<16x256xf32>
    %cst = arith.constant dense<0.000000e+00> : vector<64x256xf32>
    %3 = tpu.matmul %1, %2, %cst {dimension_numbers = #tpu.dot_dimension_numbers<[1], [0], [0], [1], [0, 0, 1, 1], [], []>} : vector<64x16xf32>, vector<16x256xf32>, vector<64x256xf32> -> vector<64x256xf32>
    %c0_4 = arith.constant 0 : index
    %c0_5 = arith.constant 0 : index
    %4 = vector.load %arg3[%c0_4, %c0_5] : memref<1x256xf32, #tpu.memory_space<vmem>>, vector<1x256xf32>
    %5 = vector.broadcast %4 : vector<1x256xf32> to vector<64x256xf32>
    %6 = arith.addf %3, %5 : vector<64x256xf32>
    %7 = vector.shape_cast %6 : vector<64x256xf32> to vector<8x8x256xf32>
    %8 = tpu.transpose %7, [1, 0, 2] : vector<8x8x256xf32> -> vector<8x8x256xf32>
    %c0_6 = arith.constant 0 : index
    %c0_7 = arith.constant 0 : index
    %c0_8 = arith.constant 0 : index
    %9 = vector.load %arg6[%c0_6, %c0_7, %c0_8] : memref<8x8x256xf32, #tpu.memory_space<vmem>>, vector<8x8x256xf32>
    tpu.vector_store %arg6[%c0_6, %c0_7, %c0_8], %8 {strides = array<i32>} : memref<8x8x256xf32, #tpu.memory_space<vmem>>, vector<8x8x256xf32>,
    %c0_9 = arith.constant 0 : index
    %c0_10 = arith.constant 0 : index
    %10 = vector.load %arg2[%c0_9, %c0_10] : memref<64x256xf32, #tpu.memory_space<vmem>>, vector<64x256xf32>
    %c0_11 = arith.constant 0 : index
    %c0_12 = arith.constant 0 : index
    %11 = vector.load %arg3[%c0_11, %c0_12] : memref<1x256xf32, #tpu.memory_space<vmem>>, vector<1x256xf32>
    %c0_13 = arith.constant 0 : index
    %c0_14 = arith.constant 0 : index
    %c0_15 = arith.constant 0 : index
    %12 = vector.load %arg6[%c0_13, %c0_14, %c0_15] : memref<8x8x256xf32, #tpu.memory_space<vmem>>, vector<1x8x256xf32>
    %13 = vector.shape_cast %12 : vector<1x8x256xf32> to vector<8x256xf32>
    %14 = arith.negf %13 : vector<8x256xf32>
    %15 = math.exp %14 : vector<8x256xf32>
    %cst_16 = arith.constant 1.000000e+00 : f32
    %16 = vector.broadcast %cst_16 : f32 to vector<8x256xf32>
    %17 = arith.addf %16, %15 : vector<8x256xf32>
    %18 = arith.divf %16, %17 : vector<8x256xf32>
    %19 = vector.extract_strided_slice %18 {offsets = [0, 0], sizes = [8, 64], strides = [1, 1]} : vector<8x256xf32> to vector<8x64xf32>
    %20 = vector.extract_strided_slice %18 {offsets = [0, 128], sizes = [8, 64], strides = [1, 1]} : vector<8x256xf32> to vector<8x64xf32>
    %cst_17 = arith.constant 2.000000e+00 : f32
    %21 = vector.broadcast %cst_17 : f32 to vector<8x64xf32>
    %22 = arith.mulf %21, %20 : vector<8x64xf32>
    %cst_18 = arith.constant 1.000000e+00 : f32
    %23 = vector.broadcast %cst_18 : f32 to vector<8x64xf32>
    %24 = arith.subf %22, %23 : vector<8x64xf32>
    %25 = vector.extract_strided_slice %18 {offsets = [0, 192], sizes = [8, 64], strides = [1, 1]} : vector<8x256xf32> to vector<8x64xf32>
    %26 = arith.mulf %19, %24 : vector<8x64xf32>
    %27 = math.tanh %26 : vector<8x64xf32>
    %28 = arith.mulf %25, %27 : vector<8x64xf32>
    %29 = tpu.iota {dimensions = array<i32: 1>} : vector<8x64xi32>
    %c32_i32 = arith.constant 32 : i32
    %30 = vector.broadcast %c32_i32 : i32 to vector<8x64xi32>
    %31 = arith.cmpi slt, %29, %30 : vector<8x64xi32>
    %cst_19 = arith.constant 0.000000e+00 : f32
    %32 = vector.broadcast %cst_19 : f32 to vector<8x64xf32>
    %33 = arith.select %31, %28, %32 : vector<8x64xi1>, vector<8x64xf32>
    %cst_20 = arith.constant 0.000000e+00 : f32
    %34 = vector.broadcast %cst_20 : f32 to vector<8x64xf32>
    %35 = arith.select %31, %26, %34 : vector<8x64xi1>, vector<8x64xf32>
    %c0_i32 = arith.constant 0 : i32
    %cst_21 = arith.constant dense<0.000000e+00> : vector<8x256xf32>
    %36 = tpu.matmul %33, %10, %cst_21 {dimension_numbers = #tpu.dot_dimension_numbers<[1], [0], [0], [1], [0, 0, 1, 1], [], []>} : vector<8x64xf32>, vector<64x256xf32>, vector<8x256xf32> -> vector<8x256xf32>
    %c1_i32 = arith.constant 1 : i32
    %37 = arith.addi %c0_i32, %c1_i32 : i32
    %38 = arith.index_cast %37 : i32 to index
    %c0_22 = arith.constant 0 : index
    %c0_23 = arith.constant 0 : index
    %39 = vector.load %arg6[%38, %c0_22, %c0_23] : memref<8x8x256xf32, #tpu.memory_space<vmem>>, vector<1x8x256xf32>
    %40 = vector.shape_cast %39 : vector<1x8x256xf32> to vector<8x256xf32>
    %41 = arith.addf %36, %40 : vector<8x256xf32>
    %42 = arith.negf %41 : vector<8x256xf32>
    %43 = math.exp %42 : vector<8x256xf32>
    %cst_24 = arith.constant 1.000000e+00 : f32
    %44 = vector.broadcast %cst_24 : f32 to vector<8x256xf32>
    %45 = arith.addf %44, %43 : vector<8x256xf32>
    %46 = arith.divf %44, %45 : vector<8x256xf32>
    %47 = vector.extract_strided_slice %46 {offsets = [0, 0], sizes = [8, 64], strides = [1, 1]} : vector<8x256xf32> to vector<8x64xf32>
    %48 = vector.extract_strided_slice %46 {offsets = [0, 64], sizes = [8, 64], strides = [1, 1]} : vector<8x256xf32> to vector<8x64xf32>
    %49 = vector.extract_strided_slice %46 {offsets = [0, 128], sizes = [8, 64], strides = [1, 1]} : vector<8x256xf32> to vector<8x64xf32>
    %cst_25 = arith.constant 2.000000e+00 : f32
    %50 = vector.broadcast %cst_25 : f32 to vector<8x64xf32>
    %51 = arith.mulf %50, %49 : vector<8x64xf32>
    %cst_26 = arith.constant 1.000000e+00 : f32
    %52 = vector.broadcast %cst_26 : f32 to vector<8x64xf32>
    %53 = arith.subf %51, %52 : vector<8x64xf32>
    %54 = vector.extract_strided_slice %46 {offsets = [0, 192], sizes = [8, 64], strides = [1, 1]} : vector<8x256xf32> to vector<8x64xf32>
    %55 = arith.mulf %48, %35 : vector<8x64xf32>
    %56 = arith.mulf %47, %53 : vector<8x64xf32>
    %57 = arith.addf %55, %56 : vector<8x64xf32>
    %58 = math.tanh %57 : vector<8x64xf32>
    %59 = arith.mulf %54, %58 : vector<8x64xf32>
    %c1_i32_27 = arith.constant 1 : i32
    %cst_28 = arith.constant dense<0.000000e+00> : vector<8x256xf32>
    %60 = tpu.matmul %59, %10, %cst_28 {dimension_numbers = #tpu.dot_dimension_numbers<[1], [0], [0], [1], [0, 0, 1, 1], [], []>} : vector<8x64xf32>, vector<64x256xf32>, vector<8x256xf32> -> vector<8x256xf32>
    %c1_i32_29 = arith.constant 1 : i32
    %61 = arith.addi %c1_i32_27, %c1_i32_29 : i32
    %62 = arith.index_cast %61 : i32 to index
    %c0_30 = arith.constant 0 : index
    %c0_31 = arith.constant 0 : index
    %63 = vector.load %arg6[%62, %c0_30, %c0_31] : memref<8x8x256xf32, #tpu.memory_space<vmem>>, vector<1x8x256xf32>
    %64 = vector.shape_cast %63 : vector<1x8x256xf32> to vector<8x256xf32>
    %65 = arith.addf %60, %64 : vector<8x256xf32>
    %66 = arith.negf %65 : vector<8x256xf32>
    %67 = math.exp %66 : vector<8x256xf32>
    %cst_32 = arith.constant 1.000000e+00 : f32
    %68 = vector.broadcast %cst_32 : f32 to vector<8x256xf32>
    %69 = arith.addf %68, %67 : vector<8x256xf32>
    %70 = arith.divf %68, %69 : vector<8x256xf32>
    %71 = vector.extract_strided_slice %70 {offsets = [0, 0], sizes = [8, 64], strides = [1, 1]} : vector<8x256xf32> to vector<8x64xf32>
    %72 = vector.extract_strided_slice %70 {offsets = [0, 64], sizes = [8, 64], strides = [1, 1]} : vector<8x256xf32> to vector<8x64xf32>
    %73 = vector.extract_strided_slice %70 {offsets = [0, 128], sizes = [8, 64], strides = [1, 1]} : vector<8x256xf32> to vector<8x64xf32>
    %cst_33 = arith.constant 2.000000e+00 : f32
    %74 = vector.broadcast %cst_33 : f32 to vector<8x64xf32>
    %75 = arith.mulf %74, %73 : vector<8x64xf32>
    %cst_34 = arith.constant 1.000000e+00 : f32
    %76 = vector.broadcast %cst_34 : f32 to vector<8x64xf32>
    %77 = arith.subf %75, %76 : vector<8x64xf32>
    %78 = vector.extract_strided_slice %70 {offsets = [0, 192], sizes = [8, 64], strides = [1, 1]} : vector<8x256xf32> to vector<8x64xf32>
    %79 = arith.mulf %72, %57 : vector<8x64xf32>
    %80 = arith.mulf %71, %77 : vector<8x64xf32>
    %81 = arith.addf %79, %80 : vector<8x64xf32>
    %82 = math.tanh %81 : vector<8x64xf32>
    %83 = arith.mulf %78, %82 : vector<8x64xf32>
    %c2_i32 = arith.constant 2 : i32
    %cst_35 = arith.constant dense<0.000000e+00> : vector<8x256xf32>
    %84 = tpu.matmul %83, %10, %cst_35 {dimension_numbers = #tpu.dot_dimension_numbers<[1], [0], [0], [1], [0, 0, 1, 1], [], []>} : vector<8x64xf32>, vector<64x256xf32>, vector<8x256xf32> -> vector<8x256xf32>
    %c1_i32_36 = arith.constant 1 : i32
    %85 = arith.addi %c2_i32, %c1_i32_36 : i32
    %86 = arith.index_cast %85 : i32 to index
    %c0_37 = arith.constant 0 : index
    %c0_38 = arith.constant 0 : index
    %87 = vector.load %arg6[%86, %c0_37, %c0_38] : memref<8x8x256xf32, #tpu.memory_space<vmem>>, vector<1x8x256xf32>
    %88 = vector.shape_cast %87 : vector<1x8x256xf32> to vector<8x256xf32>
    %89 = arith.addf %84, %88 : vector<8x256xf32>
    %90 = arith.negf %89 : vector<8x256xf32>
    %91 = math.exp %90 : vector<8x256xf32>
    %cst_39 = arith.constant 1.000000e+00 : f32
    %92 = vector.broadcast %cst_39 : f32 to vector<8x256xf32>
    %93 = arith.addf %92, %91 : vector<8x256xf32>
    %94 = arith.divf %92, %93 : vector<8x256xf32>
    %95 = vector.extract_strided_slice %94 {offsets = [0, 0], sizes = [8, 64], strides = [1, 1]} : vector<8x256xf32> to vector<8x64xf32>
    %96 = vector.extract_strided_slice %94 {offsets = [0, 64], sizes = [8, 64], strides = [1, 1]} : vector<8x256xf32> to vector<8x64xf32>
    %97 = vector.extract_strided_slice %94 {offsets = [0, 128], sizes = [8, 64], strides = [1, 1]} : vector<8x256xf32> to vector<8x64xf32>
    %cst_40 = arith.constant 2.000000e+00 : f32
    %98 = vector.broadcast %cst_40 : f32 to vector<8x64xf32>
    %99 = arith.mulf %98, %97 : vector<8x64xf32>
    %cst_41 = arith.constant 1.000000e+00 : f32
    %100 = vector.broadcast %cst_41 : f32 to vector<8x64xf32>
    %101 = arith.subf %99, %100 : vector<8x64xf32>
    %102 = vector.extract_strided_slice %94 {offsets = [0, 192], sizes = [8, 64], strides = [1, 1]} : vector<8x256xf32> to vector<8x64xf32>
    %103 = arith.mulf %96, %81 : vector<8x64xf32>
    %104 = arith.mulf %95, %101 : vector<8x64xf32>
    %105 = arith.addf %103, %104 : vector<8x64xf32>
    %106 = math.tanh %105 : vector<8x64xf32>
    %107 = arith.mulf %102, %106 : vector<8x64xf32>
    %c3_i32 = arith.constant 3 : i32
    %cst_42 = arith.constant dense<0.000000e+00> : vector<8x256xf32>
    %108 = tpu.matmul %107, %10, %cst_42 {dimension_numbers = #tpu.dot_dimension_numbers<[1], [0], [0], [1], [0, 0, 1, 1], [], []>} : vector<8x64xf32>, vector<64x256xf32>, vector<8x256xf32> -> vector<8x256xf32>
    %c1_i32_43 = arith.constant 1 : i32
    %109 = arith.addi %c3_i32, %c1_i32_43 : i32
    %110 = arith.index_cast %109 : i32 to index
    %c0_44 = arith.constant 0 : index
    %c0_45 = arith.constant 0 : index
    %111 = vector.load %arg6[%110, %c0_44, %c0_45] : memref<8x8x256xf32, #tpu.memory_space<vmem>>, vector<1x8x256xf32>
    %112 = vector.shape_cast %111 : vector<1x8x256xf32> to vector<8x256xf32>
    %113 = arith.addf %108, %112 : vector<8x256xf32>
    %114 = arith.negf %113 : vector<8x256xf32>
    %115 = math.exp %114 : vector<8x256xf32>
    %cst_46 = arith.constant 1.000000e+00 : f32
    %116 = vector.broadcast %cst_46 : f32 to vector<8x256xf32>
    %117 = arith.addf %116, %115 : vector<8x256xf32>
    %118 = arith.divf %116, %117 : vector<8x256xf32>
    %119 = vector.extract_strided_slice %118 {offsets = [0, 0], sizes = [8, 64], strides = [1, 1]} : vector<8x256xf32> to vector<8x64xf32>
    %120 = vector.extract_strided_slice %118 {offsets = [0, 64], sizes = [8, 64], strides = [1, 1]} : vector<8x256xf32> to vector<8x64xf32>
    %121 = vector.extract_strided_slice %118 {offsets = [0, 128], sizes = [8, 64], strides = [1, 1]} : vector<8x256xf32> to vector<8x64xf32>
    %cst_47 = arith.constant 2.000000e+00 : f32
    %122 = vector.broadcast %cst_47 : f32 to vector<8x64xf32>
    %123 = arith.mulf %122, %121 : vector<8x64xf32>
    %cst_48 = arith.constant 1.000000e+00 : f32
    %124 = vector.broadcast %cst_48 : f32 to vector<8x64xf32>
    %125 = arith.subf %123, %124 : vector<8x64xf32>
    %126 = vector.extract_strided_slice %118 {offsets = [0, 192], sizes = [8, 64], strides = [1, 1]} : vector<8x256xf32> to vector<8x64xf32>
    %127 = arith.mulf %120, %105 : vector<8x64xf32>
    %128 = arith.mulf %119, %125 : vector<8x64xf32>
    %129 = arith.addf %127, %128 : vector<8x64xf32>
    %130 = math.tanh %129 : vector<8x64xf32>
    %131 = arith.mulf %126, %130 : vector<8x64xf32>
    %c4_i32 = arith.constant 4 : i32
    %cst_49 = arith.constant dense<0.000000e+00> : vector<8x256xf32>
    %132 = tpu.matmul %131, %10, %cst_49 {dimension_numbers = #tpu.dot_dimension_numbers<[1], [0], [0], [1], [0, 0, 1, 1], [], []>} : vector<8x64xf32>, vector<64x256xf32>, vector<8x256xf32> -> vector<8x256xf32>
    %c1_i32_50 = arith.constant 1 : i32
    %133 = arith.addi %c4_i32, %c1_i32_50 : i32
    %134 = arith.index_cast %133 : i32 to index
    %c0_51 = arith.constant 0 : index
    %c0_52 = arith.constant 0 : index
    %135 = vector.load %arg6[%134, %c0_51, %c0_52] : memref<8x8x256xf32, #tpu.memory_space<vmem>>, vector<1x8x256xf32>
    %136 = vector.shape_cast %135 : vector<1x8x256xf32> to vector<8x256xf32>
    %137 = arith.addf %132, %136 : vector<8x256xf32>
    %138 = arith.negf %137 : vector<8x256xf32>
    %139 = math.exp %138 : vector<8x256xf32>
    %cst_53 = arith.constant 1.000000e+00 : f32
    %140 = vector.broadcast %cst_53 : f32 to vector<8x256xf32>
    %141 = arith.addf %140, %139 : vector<8x256xf32>
    %142 = arith.divf %140, %141 : vector<8x256xf32>
    %143 = vector.extract_strided_slice %142 {offsets = [0, 0], sizes = [8, 64], strides = [1, 1]} : vector<8x256xf32> to vector<8x64xf32>
    %144 = vector.extract_strided_slice %142 {offsets = [0, 64], sizes = [8, 64], strides = [1, 1]} : vector<8x256xf32> to vector<8x64xf32>
    %145 = vector.extract_strided_slice %142 {offsets = [0, 128], sizes = [8, 64], strides = [1, 1]} : vector<8x256xf32> to vector<8x64xf32>
    %cst_54 = arith.constant 2.000000e+00 : f32
    %146 = vector.broadcast %cst_54 : f32 to vector<8x64xf32>
    %147 = arith.mulf %146, %145 : vector<8x64xf32>
    %cst_55 = arith.constant 1.000000e+00 : f32
    %148 = vector.broadcast %cst_55 : f32 to vector<8x64xf32>
    %149 = arith.subf %147, %148 : vector<8x64xf32>
    %150 = vector.extract_strided_slice %142 {offsets = [0, 192], sizes = [8, 64], strides = [1, 1]} : vector<8x256xf32> to vector<8x64xf32>
    %151 = arith.mulf %144, %129 : vector<8x64xf32>
    %152 = arith.mulf %143, %149 : vector<8x64xf32>
    %153 = arith.addf %151, %152 : vector<8x64xf32>
    %154 = math.tanh %153 : vector<8x64xf32>
    %155 = arith.mulf %150, %154 : vector<8x64xf32>
    %c5_i32 = arith.constant 5 : i32
    %cst_56 = arith.constant dense<0.000000e+00> : vector<8x256xf32>
    %156 = tpu.matmul %155, %10, %cst_56 {dimension_numbers = #tpu.dot_dimension_numbers<[1], [0], [0], [1], [0, 0, 1, 1], [], []>} : vector<8x64xf32>, vector<64x256xf32>, vector<8x256xf32> -> vector<8x256xf32>
    %c1_i32_57 = arith.constant 1 : i32
    %157 = arith.addi %c5_i32, %c1_i32_57 : i32
    %158 = arith.index_cast %157 : i32 to index
    %c0_58 = arith.constant 0 : index
    %c0_59 = arith.constant 0 : index
    %159 = vector.load %arg6[%158, %c0_58, %c0_59] : memref<8x8x256xf32, #tpu.memory_space<vmem>>, vector<1x8x256xf32>
    %160 = vector.shape_cast %159 : vector<1x8x256xf32> to vector<8x256xf32>
    %161 = arith.addf %156, %160 : vector<8x256xf32>
    %162 = arith.negf %161 : vector<8x256xf32>
    %163 = math.exp %162 : vector<8x256xf32>
    %cst_60 = arith.constant 1.000000e+00 : f32
    %164 = vector.broadcast %cst_60 : f32 to vector<8x256xf32>
    %165 = arith.addf %164, %163 : vector<8x256xf32>
    %166 = arith.divf %164, %165 : vector<8x256xf32>
    %167 = vector.extract_strided_slice %166 {offsets = [0, 0], sizes = [8, 64], strides = [1, 1]} : vector<8x256xf32> to vector<8x64xf32>
    %168 = vector.extract_strided_slice %166 {offsets = [0, 64], sizes = [8, 64], strides = [1, 1]} : vector<8x256xf32> to vector<8x64xf32>
    %169 = vector.extract_strided_slice %166 {offsets = [0, 128], sizes = [8, 64], strides = [1, 1]} : vector<8x256xf32> to vector<8x64xf32>
    %cst_61 = arith.constant 2.000000e+00 : f32
    %170 = vector.broadcast %cst_61 : f32 to vector<8x64xf32>
    %171 = arith.mulf %170, %169 : vector<8x64xf32>
    %cst_62 = arith.constant 1.000000e+00 : f32
    %172 = vector.broadcast %cst_62 : f32 to vector<8x64xf32>
    %173 = arith.subf %171, %172 : vector<8x64xf32>
    %174 = vector.extract_strided_slice %166 {offsets = [0, 192], sizes = [8, 64], strides = [1, 1]} : vector<8x256xf32> to vector<8x64xf32>
    %175 = arith.mulf %168, %153 : vector<8x64xf32>
    %176 = arith.mulf %167, %173 : vector<8x64xf32>
    %177 = arith.addf %175, %176 : vector<8x64xf32>
    %178 = math.tanh %177 : vector<8x64xf32>
    %179 = arith.mulf %174, %178 : vector<8x64xf32>
    %c6_i32 = arith.constant 6 : i32
    %cst_63 = arith.constant dense<0.000000e+00> : vector<8x256xf32>
    %180 = tpu.matmul %179, %10, %cst_63 {dimension_numbers = #tpu.dot_dimension_numbers<[1], [0], [0], [1], [0, 0, 1, 1], [], []>} : vector<8x64xf32>, vector<64x256xf32>, vector<8x256xf32> -> vector<8x256xf32>
    %c1_i32_64 = arith.constant 1 : i32
    %181 = arith.addi %c6_i32, %c1_i32_64 : i32
    %182 = arith.index_cast %181 : i32 to index
    %c0_65 = arith.constant 0 : index
    %c0_66 = arith.constant 0 : index
    %183 = vector.load %arg6[%182, %c0_65, %c0_66] : memref<8x8x256xf32, #tpu.memory_space<vmem>>, vector<1x8x256xf32>
    %184 = vector.shape_cast %183 : vector<1x8x256xf32> to vector<8x256xf32>
    %185 = arith.addf %180, %184 : vector<8x256xf32>
    %186 = arith.negf %185 : vector<8x256xf32>
    %187 = math.exp %186 : vector<8x256xf32>
    %cst_67 = arith.constant 1.000000e+00 : f32
    %188 = vector.broadcast %cst_67 : f32 to vector<8x256xf32>
    %189 = arith.addf %188, %187 : vector<8x256xf32>
    %190 = arith.divf %188, %189 : vector<8x256xf32>
    %191 = vector.extract_strided_slice %190 {offsets = [0, 0], sizes = [8, 64], strides = [1, 1]} : vector<8x256xf32> to vector<8x64xf32>
    %192 = vector.extract_strided_slice %190 {offsets = [0, 64], sizes = [8, 64], strides = [1, 1]} : vector<8x256xf32> to vector<8x64xf32>
    %193 = vector.extract_strided_slice %190 {offsets = [0, 128], sizes = [8, 64], strides = [1, 1]} : vector<8x256xf32> to vector<8x64xf32>
    %cst_68 = arith.constant 2.000000e+00 : f32
    %194 = vector.broadcast %cst_68 : f32 to vector<8x64xf32>
    %195 = arith.mulf %194, %193 : vector<8x64xf32>
    %cst_69 = arith.constant 1.000000e+00 : f32
    %196 = vector.broadcast %cst_69 : f32 to vector<8x64xf32>
    %197 = arith.subf %195, %196 : vector<8x64xf32>
    %198 = vector.extract_strided_slice %190 {offsets = [0, 192], sizes = [8, 64], strides = [1, 1]} : vector<8x256xf32> to vector<8x64xf32>
    %199 = arith.mulf %192, %177 : vector<8x64xf32>
    %200 = arith.mulf %191, %197 : vector<8x64xf32>
    %201 = arith.addf %199, %200 : vector<8x64xf32>
    %202 = math.tanh %201 : vector<8x64xf32>
    %203 = arith.mulf %198, %202 : vector<8x64xf32>
    %c7_i32 = arith.constant 7 : i32
    %cst_70 = arith.constant dense<0.000000e+00> : vector<8x256xf32>
    %204 = tpu.matmul %203, %10, %cst_70 {dimension_numbers = #tpu.dot_dimension_numbers<[1], [0], [0], [1], [0, 0, 1, 1], [], []>} : vector<8x64xf32>, vector<64x256xf32>, vector<8x256xf32> -> vector<8x256xf32>
    %205 = vector.broadcast %11 : vector<1x256xf32> to vector<8x256xf32>
    %206 = arith.addf %204, %205 : vector<8x256xf32>
    %207 = arith.negf %206 : vector<8x256xf32>
    %208 = math.exp %207 : vector<8x256xf32>
    %cst_71 = arith.constant 1.000000e+00 : f32
    %209 = vector.broadcast %cst_71 : f32 to vector<8x256xf32>
    %210 = arith.addf %209, %208 : vector<8x256xf32>
    %211 = arith.divf %209, %210 : vector<8x256xf32>
    %212 = vector.extract_strided_slice %211 {offsets = [0, 0], sizes = [8, 64], strides = [1, 1]} : vector<8x256xf32> to vector<8x64xf32>
    %213 = vector.extract_strided_slice %211 {offsets = [0, 64], sizes = [8, 64], strides = [1, 1]} : vector<8x256xf32> to vector<8x64xf32>
    %214 = vector.extract_strided_slice %211 {offsets = [0, 128], sizes = [8, 64], strides = [1, 1]} : vector<8x256xf32> to vector<8x64xf32>
    %cst_72 = arith.constant 2.000000e+00 : f32
    %215 = vector.broadcast %cst_72 : f32 to vector<8x64xf32>
    %216 = arith.mulf %215, %214 : vector<8x64xf32>
    %cst_73 = arith.constant 1.000000e+00 : f32
    %217 = vector.broadcast %cst_73 : f32 to vector<8x64xf32>
    %218 = arith.subf %216, %217 : vector<8x64xf32>
    %219 = vector.extract_strided_slice %211 {offsets = [0, 192], sizes = [8, 64], strides = [1, 1]} : vector<8x256xf32> to vector<8x64xf32>
    %220 = arith.mulf %213, %201 : vector<8x64xf32>
    %221 = arith.mulf %212, %218 : vector<8x64xf32>
    %222 = arith.addf %220, %221 : vector<8x64xf32>
    %223 = math.tanh %222 : vector<8x64xf32>
    %224 = arith.mulf %219, %223 : vector<8x64xf32>
    %225 = vector.extract_strided_slice %203 {offsets = [0, 0], sizes = [8, 32], strides = [1, 1]} : vector<8x64xf32> to vector<8x32xf32>
    %c0_74 = arith.constant 0 : index
    %c0_75 = arith.constant 0 : index
    %c0_76 = arith.constant 0 : index
    %226 = vector.load %arg4[%c0_74, %c0_75, %c0_76] : memref<2x8x32xf32, #tpu.memory_space<vmem>>, vector<1x8x32xf32>
    %227 = vector.shape_cast %226 : vector<1x8x32xf32> to vector<8x32xf32>
    %228 = vector.shape_cast %225 : vector<8x32xf32> to vector<1x8x32xf32>
    tpu.vector_store %arg4[%c0_74, %c0_75, %c0_76], %228 {strides = array<i32>} : memref<2x8x32xf32, #tpu.memory_space<vmem>>, vector<1x8x32xf32>,
    %229 = vector.extract_strided_slice %201 {offsets = [0, 0], sizes = [8, 32], strides = [1, 1]} : vector<8x64xf32> to vector<8x32xf32>
    %c0_77 = arith.constant 0 : index
    %c0_78 = arith.constant 0 : index
    %c0_79 = arith.constant 0 : index
    %230 = vector.load %arg5[%c0_77, %c0_78, %c0_79] : memref<2x8x32xf32, #tpu.memory_space<vmem>>, vector<1x8x32xf32>
    %231 = vector.shape_cast %230 : vector<1x8x32xf32> to vector<8x32xf32>
    %232 = vector.shape_cast %229 : vector<8x32xf32> to vector<1x8x32xf32>
    tpu.vector_store %arg5[%c0_77, %c0_78, %c0_79], %232 {strides = array<i32>} : memref<2x8x32xf32, #tpu.memory_space<vmem>>, vector<1x8x32xf32>,
    %233 = vector.extract_strided_slice %224 {offsets = [0, 32], sizes = [8, 32], strides = [1, 1]} : vector<8x64xf32> to vector<8x32xf32>
    %c1 = arith.constant 1 : index
    %c0_80 = arith.constant 0 : index
    %c0_81 = arith.constant 0 : index
    %234 = vector.load %arg4[%c1, %c0_80, %c0_81] : memref<2x8x32xf32, #tpu.memory_space<vmem>>, vector<1x8x32xf32>
    %235 = vector.shape_cast %234 : vector<1x8x32xf32> to vector<8x32xf32>
    %236 = vector.shape_cast %233 : vector<8x32xf32> to vector<1x8x32xf32>
    tpu.vector_store %arg4[%c1, %c0_80, %c0_81], %236 {strides = array<i32>} : memref<2x8x32xf32, #tpu.memory_space<vmem>>, vector<1x8x32xf32>,
    %237 = vector.extract_strided_slice %222 {offsets = [0, 32], sizes = [8, 32], strides = [1, 1]} : vector<8x64xf32> to vector<8x32xf32>
    %c1_82 = arith.constant 1 : index
    %c0_83 = arith.constant 0 : index
    %c0_84 = arith.constant 0 : index
    %238 = vector.load %arg5[%c1_82, %c0_83, %c0_84] : memref<2x8x32xf32, #tpu.memory_space<vmem>>, vector<1x8x32xf32>
    %239 = vector.shape_cast %238 : vector<1x8x32xf32> to vector<8x32xf32>
    %240 = vector.shape_cast %237 : vector<8x32xf32> to vector<1x8x32xf32>
    tpu.vector_store %arg5[%c1_82, %c0_83, %c0_84], %240 {strides = array<i32>} : memref<2x8x32xf32, #tpu.memory_space<vmem>>, vector<1x8x32xf32>,
    return
  }
}

</mosaic_0001>

<llo_original>
// kernel: encoder_forward.1
$region0: #{encoder_forward.1}
  #allocation0 [shape = 'u32[]', space=smem, size = 0x4, offset = 0x4, fixed_abs, tag = 'smem constant byte address 0x4 - core index']
  #allocation1 [shape = 'u32[144,128]{1,0:T(1,128)}', space=vmem, size = 0x12000, scoped, tag = 'internal scratch']
  #allocation2 [shape = 'f32[8,8,256]{2,1,0:T(8,128)}', space=vmem, size = 0x10000, scoped, tag = 'scratch operand']
  %s0 = inlined_call_operand.vmem [shape: f32[8,8,16], index: 0, kind: input, shape index: {}]
  %s1 = inlined_call_operand.vmem [shape: f32[16,256], index: 1, kind: input, shape index: {}]
  %s2 = inlined_call_operand.vmem [shape: f32[64,256], index: 2, kind: input, shape index: {}]
  %s3 = inlined_call_operand.vmem [shape: f32[1,256], index: 3, kind: input, shape index: {}]
  %s4 = inlined_call_operand.hbm [shape: f32[2,8,32], index: 4, kind: output, shape index: {0}]
  %s5 = inlined_call_operand.hbm [shape: f32[2,8,32], index: 5, kind: output, shape index: {1}]
  %6 = xla_tuple %s4, %s5
  %s7 = sld [smem:[#allocation0]]
  $region34: #{encoder_forward.1} parent=0
    _
  %s9 = ssub.s32 1, %s7
  %s10 = scalar_select 0, %s9, %s7
  $region1: #{encoder_forward.1} parent=0
    #allocation3 [shape = 'u8[8192]{0}', space=vmem, size = 0x2000, scoped, tag = 'output window, operand 0, single buffered']
    #allocation4 [shape = 's32[1]{0}', space=sflag, size = 0x4, scoped, tag = 'scoped memory for encoder_forward.1']
    #allocation5 [shape = 'u8[8192]{0}', space=vmem, size = 0x2000, scoped, tag = 'output window, operand 1, single buffered']
    #allocation6 [shape = 's32[1]{0}', space=sflag, size = 0x4, scoped, tag = 'scoped memory for encoder_forward.1']
    %11 = vsyncpa [#allocation4], 0
    %12 = vsyncpa [#allocation6], 0
    // Predicated region
    $region2: #{encoder_forward.1} parent=1 // pred_check
      _
    $region3: #{encoder_forward.1} parent=1 // pred_check_branch
      %14 = sbr.rel (0) target = $region5
    $region4: #{encoder_forward.1} parent=1 // pred_region
      _
    $region5: #{encoder_forward.1} parent=1 // pred_fallthru
      _
    // Predicated region
    $region6: #{encoder_forward.1} parent=1 // pred_check
      _
    $region7: #{encoder_forward.1} parent=1 // pred_check_branch
      %16 = sbr.rel (0) target = $region9
    $region8: #{encoder_forward.1} parent=1 // pred_region
      _
    $region9: #{encoder_forward.1} parent=1 // pred_fallthru
      _
    // Predicated region
    $region10: #{encoder_forward.1} parent=1 // pred_check
      _
    $region11: #{encoder_forward.1} parent=1 // pred_check_branch
      %18 = sbr.rel (0) target = $region13
    $region12: #{encoder_forward.1} parent=1 // pred_region
      _
    $region13: #{encoder_forward.1} parent=1 // pred_fallthru
      _
    // Predicated region
    $region14: #{encoder_forward.1} parent=1 // pred_check
      _
    $region15: #{encoder_forward.1} parent=1 // pred_check_branch
      %20 = sbr.rel (0) target = $region17
    $region16: #{encoder_forward.1} parent=1 // pred_region
      _
    $region17: #{encoder_forward.1} parent=1 // pred_fallthru
      _
    %v21 = vld [vmem:[%s0] sm:$0xff]
    %v22 = vld [vmem:[%s0 + $0x8] sm:$0xff]
    %v23 = vld [vmem:[%s0 + $0x10] sm:$0xff]
    %v24 = vld [vmem:[%s0 + $0x18] sm:$0xff]
    %v25 = vld [vmem:[%s0 + $0x20] sm:$0xff]
    %v26 = vld [vmem:[%s0 + $0x28] sm:$0xff]
    %v27 = vld [vmem:[%s0 + $0x30] sm:$0xff]
    %v28 = vld [vmem:[%s0 + $0x38] sm:$0xff]
    %v29 = vld [vmem:[%s1] sm:$0xff]
    %v30 = vld [vmem:[%s1 + $0x8] sm:$0xff]
    %v31 = vld [vmem:[%s1 + $0x10] sm:$0xff]
    %v32 = vld [vmem:[%s1 + $0x18] sm:$0xff]
    %v33 = vld [vmem:[%s3] sm:$0x3]
    %v35 = vlaneseq
    %v36 = vshrl.u32 %v35, 7
    %v37 = vsub.s32 0, %v36
    %v38 = vrot.slane %v33, %v37
    %v39 = vlaneseq
    %v40 = vshrl.u32 %v39, 7
    %v41 = vsub.s32 1, %v40
    %v42 = vrot.slane %v33, %v41
    %vm45 = vcmask 130048
    %v47 = vsel %vm45, %v21, 0
    %v50 = vsel %vm45, %v22, 0
    %v53 = vsel %vm45, %v23, 0
    %v56 = vsel %vm45, %v24, 0
    %v59 = vsel %vm45, %v25, 0
    %v62 = vsel %vm45, %v26, 0
    %v65 = vsel %vm45, %v27, 0
    %v68 = vsel %vm45, %v28, 0
    %70 = vmatprep.subr.mxu0 0.0
    %71 = vmatpush1.msra.mxu0 0.0
    %72 = vmatprep.subr.mxu0 0.0
    %73 = vmatpush1.msra.mxu0 0.0
    %74 = vmatprep.subr.mxu0 0.0
    %75 = vmatpush1.msra.mxu0 0.0
    %76 = vmatprep.subr.mxu0 0.0
    %77 = vmatpush1.msra.mxu0 0.0
    %78 = vmatprep.subr.mxu0 0.0
    %79 = vmatpush1.msra.mxu0 0.0
    %80 = vmatprep.subr.mxu0 0.0
    %81 = vmatpush1.msra.mxu0 0.0
    %82 = vmatprep.subr.mxu0 0.0
    %83 = vmatpush1.msra.mxu0 0.0
    %84 = vmatprep.subr.mxu0 0.0
    %85 = vmatpush1.msra.mxu0 0.0
    %86 = vmatprep.subr.mxu0 0.0
    %87 = vmatpush1.msra.mxu0 0.0
    %88 = vmatprep.subr.mxu0 0.0
    %89 = vmatpush1.msra.mxu0 0.0
    %90 = vmatprep.subr.mxu0 0.0
    %91 = vmatpush1.msra.mxu0 0.0
    %92 = vmatprep.subr.mxu0 0.0
    %93 = vmatpush1.msra.mxu0 0.0
    %94 = vmatprep.subr.mxu0 0.0
    %95 = vmatpush1.msra.mxu0 0.0
    %96 = vmatprep.subr.mxu0 0.0
    %97 = vmatpush1.msra.mxu0 0.0
    %98 = vmatprep.subr.mxu0 %v32
    %99 = vmatpush1.msra.mxu0 %v31
    %100 = vmatprep.subr.mxu0 %v30
    %101 = vmatpush1.msra.mxu0 %v29
    %102 = vmatprep.subr.mxu0 0.0
    %103 = vmatpush2.msra.mxu0 0.0
    %104 = vmatprep.subr.mxu0 0.0
    %105 = vmatpush2.msra.mxu0 0.0
    %106 = vmatprep.subr.mxu0 0.0
    %107 = vmatpush2.msra.mxu0 0.0
    %108 = vmatprep.subr.mxu0 0.0
    %109 = vmatpush2.msra.mxu0 0.0
    %110 = vmatprep.subr.mxu0 0.0
    %111 = vmatpush2.msra.mxu0 0.0
    %112 = vmatprep.subr.mxu0 0.0
    %113 = vmatpush2.msra.mxu0 0.0
    %114 = vmatprep.subr.mxu0 0.0
    %115 = vmatpush2.msra.mxu0 0.0
    %116 = vmatprep.subr.mxu0 0.0
    %117 = vmatpush2.msra.mxu0 0.0
    %118 = vmatprep.subr.mxu0 0.0
    %119 = vmatpush2.msra.mxu0 0.0
    %120 = vmatprep.subr.mxu0 0.0
    %121 = vmatpush2.msra.mxu0 0.0
    %122 = vmatprep.subr.mxu0 0.0
    %123 = vmatpush2.msra.mxu0 0.0
    %124 = vmatprep.subr.mxu0 0.0
    %125 = vmatpush2.msra.mxu0 0.0
    %126 = vmatprep.subr.mxu0 0.0
    %127 = vmatpush2.msra.mxu0 0.0
    %128 = vmatprep.subr.mxu0 0.0
    %129 = vmatpush2.msra.mxu0 0.0
    %130 = vmatprep.subr.mxu0 0.0
    %131 = vmatpush2.msra.mxu0 0.0
    %132 = vmatprep.subr.mxu0 0.0
    %133 = vmatpush2.msra.mxu0 0.0
    %134 = vmatprep.mubr.f32.mxu0 0.0
    %135 = vmatmul.mubr.f32.gmra.mxu0 %v47
    %v136 = vpop.f32.mrf.mxu0
    %v137 = vadd.f32 %v38, %v136
    %v138 = vpop.f32.mrf.mxu0
    %v139 = vadd.f32 %v42, %v138
    %140 = vmatprep.mubr.f32.mxu0 0.0
    %141 = vmatmul.mubr.f32.gmra.mxu0 %v50
    %v142 = vpop.f32.mrf.mxu0
    %v143 = vadd.f32 %v38, %v142
    %v144 = vpop.f32.mrf.mxu0
    %v145 = vadd.f32 %v42, %v144
    %146 = vmatprep.mubr.f32.mxu0 0.0
    %147 = vmatmul.mubr.f32.gmra.mxu0 %v53
    %v148 = vpop.f32.mrf.mxu0
    %v149 = vadd.f32 %v38, %v148
    %v150 = vpop.f32.mrf.mxu0
    %v151 = vadd.f32 %v42, %v150
    %152 = vmatprep.mubr.f32.mxu0 0.0
    %153 = vmatmul.mubr.f32.gmra.mxu0 %v56
    %v154 = vpop.f32.mrf.mxu0
    %v155 = vadd.f32 %v38, %v154
    %v156 = vpop.f32.mrf.mxu0
    %v157 = vadd.f32 %v42, %v156
    %158 = vmatprep.mubr.f32.mxu0 0.0
    %159 = vmatmul.mubr.f32.gmra.mxu0 %v59
    %v160 = vpop.f32.mrf.mxu0
    %v161 = vadd.f32 %v38, %v160
    %v162 = vpop.f32.mrf.mxu0
    %v163 = vadd.f32 %v42, %v162
    %164 = vmatprep.mubr.f32.mxu0 0.0
    %165 = vmatmul.mubr.f32.gmra.mxu0 %v62
    %v166 = vpop.f32.mrf.mxu0
    %v167 = vadd.f32 %v38, %v166
    %v168 = vpop.f32.mrf.mxu0
    %v169 = vadd.f32 %v42, %v168
    %170 = vmatprep.mubr.f32.mxu0 0.0
    %171 = vmatmul.mubr.f32.gmra.mxu0 %v65
    %v172 = vpop.f32.mrf.mxu0
    %v173 = vadd.f32 %v38, %v172
    %v174 = vpop.f32.mrf.mxu0
    %v175 = vadd.f32 %v42, %v174
    %176 = vmatprep.mubr.f32.mxu0 0.0
    %177 = vmatmul.mubr.f32.gmra.mxu0 %v68
    %v178 = vpop.f32.mrf.mxu0
    %v179 = vadd.f32 %v38, %v178
    %v180 = vpop.f32.mrf.mxu0
    %v181 = vadd.f32 %v42, %v180
    %182 = vdwg.mxu0
    %v183 = vcombine.low %v137, %v149
    %v184 = vcombine.high %v137, %v149
    %v186 = vunpack.c.l.s4 1983009808
    %v187 = vunpack.c.0.s8 %v186
    %v188 = vlaneseq
    %v189 = vshrl.u32 %v188, 7
    %v190 = vsub.s32 %v187, %v189
    %v191 = vrot.slane %v183, %v190
    %v193 = vunpack.c.l.s4 1983009808
    %v194 = vunpack.c.0.s8 %v193
    %v195 = vlaneseq
    %v196 = vshrl.u32 %v195, 7
    %v197 = vsub.s32 %v194, %v196
    %v198 = vrot.slane %v184, %v197
    %v199 = vcombine.low %v143, %v155
    %v200 = vcombine.high %v143, %v155
    %v202 = vunpack.c.l.s4 1983009808
    %v203 = vunpack.c.0.s8 %v202
    %v204 = vlaneseq
    %v205 = vshrl.u32 %v204, 7
    %v206 = vsub.s32 %v203, %v205
    %v207 = vrot.slane %v199, %v206
    %v209 = vunpack.c.l.s4 1983009808
    %v210 = vunpack.c.0.s8 %v209
    %v211 = vlaneseq
    %v212 = vshrl.u32 %v211, 7
    %v213 = vsub.s32 %v210, %v212
    %v214 = vrot.slane %v200, %v213
    %v215 = vcombine.low %v161, %v173
    %v216 = vcombine.high %v161, %v173
    %v218 = vunpack.c.l.s4 1983009808
    %v219 = vunpack.c.0.s8 %v218
    %v220 = vlaneseq
    %v221 = vshrl.u32 %v220, 7
    %v222 = vsub.s32 %v219, %v221
    %v223 = vrot.slane %v215, %v222
    %v225 = vunpack.c.l.s4 1983009808
    %v226 = vunpack.c.0.s8 %v225
    %v227 = vlaneseq
    %v228 = vshrl.u32 %v227, 7
    %v229 = vsub.s32 %v226, %v228
    %v230 = vrot.slane %v216, %v229
    %v231 = vcombine.low %v167, %v179
    %v232 = vcombine.high %v167, %v179
    %v234 = vunpack.c.l.s4 1983009808
    %v235 = vunpack.c.0.s8 %v234
    %v236 = vlaneseq
    %v237 = vshrl.u32 %v236, 7
    %v238 = vsub.s32 %v235, %v237
    %v239 = vrot.slane %v231, %v238
    %v241 = vunpack.c.l.s4 1983009808
    %v242 = vunpack.c.0.s8 %v241
    %v243 = vlaneseq
    %v244 = vshrl.u32 %v243, 7
    %v245 = vsub.s32 %v242, %v244
    %v246 = vrot.slane %v232, %v245
    %v247 = vcombine.low %v191, %v207
    %v248 = vcombine.high %v191, %v207
    %v250 = vunpack.c.l.s4 1934713408
    %v251 = vunpack.c.0.s8 %v250
    %v252 = vlaneseq
    %v253 = vshrl.u32 %v252, 7
    %v254 = vsub.s32 %v251, %v253
    %v255 = vrot.slane %v247, %v254
    %v257 = vunpack.c.l.s4 1934713408
    %v258 = vunpack.c.0.s8 %v257
    %v259 = vlaneseq
    %v260 = vshrl.u32 %v259, 7
    %v261 = vsub.s32 %v258, %v260
    %v262 = vrot.slane %v248, %v261
    %v263 = vcombine.low %v198, %v214
    %v264 = vcombine.high %v198, %v214
    %v266 = vunpack.c.l.s4 1934713408
    %v267 = vunpack.c.0.s8 %v266
    %v268 = vlaneseq
    %v269 = vshrl.u32 %v268, 7
    %v270 = vsub.s32 %v267, %v269
    %v271 = vrot.slane %v263, %v270
    %v273 = vunpack.c.l.s4 1934713408
    %v274 = vunpack.c.0.s8 %v273
    %v275 = vlaneseq
    %v276 = vshrl.u32 %v275, 7
    %v277 = vsub.s32 %v274, %v276
    %v278 = vrot.slane %v264, %v277
    %v279 = vcombine.low %v223, %v239
    %v280 = vcombine.high %v223, %v239
    %v282 = vunpack.c.l.s4 1934713408
    %v283 = vunpack.c.0.s8 %v282
    %v284 = vlaneseq
    %v285 = vshrl.u32 %v284, 7
    %v286 = vsub.s32 %v283, %v285
    %v287 = vrot.slane %v279, %v286
    %v289 = vunpack.c.l.s4 1934713408
    %v290 = vunpack.c.0.s8 %v289
    %v291 = vlaneseq
    %v292 = vshrl.u32 %v291, 7
    %v293 = vsub.s32 %v290, %v292
    %v294 = vrot.slane %v280, %v293
    %v295 = vcombine.low %v230, %v246
    %v296 = vcombine.high %v230, %v246
    %v298 = vunpack.c.l.s4 1934713408
    %v299 = vunpack.c.0.s8 %v298
    %v300 = vlaneseq
    %v301 = vshrl.u32 %v300, 7
    %v302 = vsub.s32 %v299, %v301
    %v303 = vrot.slane %v295, %v302
    %v305 = vunpack.c.l.s4 1934713408
    %v306 = vunpack.c.0.s8 %v305
    %v307 = vlaneseq
    %v308 = vshrl.u32 %v307, 7
    %v309 = vsub.s32 %v306, %v308
    %v310 = vrot.slane %v296, %v309
    %v311 = vcombine.low %v255, %v287
    %v312 = vcombine.high %v255, %v287
    %v313 = vcombine.low %v262, %v294
    %v314 = vcombine.high %v262, %v294
    %v315 = vcombine.low %v271, %v303
    %v316 = vcombine.high %v271, %v303
    %v317 = vcombine.low %v278, %v310
    %v318 = vcombine.high %v278, %v310
    %v319 = vcombine.low %v139, %v151
    %v320 = vcombine.high %v139, %v151
    %v322 = vunpack.c.l.s4 1983009808
    %v323 = vunpack.c.0.s8 %v322
    %v324 = vlaneseq
    %v325 = vshrl.u32 %v324, 7
    %v326 = vsub.s32 %v323, %v325
    %v327 = vrot.slane %v319, %v326
    %v329 = vunpack.c.l.s4 1983009808
    %v330 = vunpack.c.0.s8 %v329
    %v331 = vlaneseq
    %v332 = vshrl.u32 %v331, 7
    %v333 = vsub.s32 %v330, %v332
    %v334 = vrot.slane %v320, %v333
    %v335 = vcombine.low %v145, %v157
    %v336 = vcombine.high %v145, %v157
    %v338 = vunpack.c.l.s4 1983009808
    %v339 = vunpack.c.0.s8 %v338
    %v340 = vlaneseq
    %v341 = vshrl.u32 %v340, 7
    %v342 = vsub.s32 %v339, %v341
    %v343 = vrot.slane %v335, %v342
    %v345 = vunpack.c.l.s4 1983009808
    %v346 = vunpack.c.0.s8 %v345
    %v347 = vlaneseq
    %v348 = vshrl.u32 %v347, 7
    %v349 = vsub.s32 %v346, %v348
    %v350 = vrot.slane %v336, %v349
    %v351 = vcombine.low %v163, %v175
    %v352 = vcombine.high %v163, %v175
    %v354 = vunpack.c.l.s4 1983009808
    %v355 = vunpack.c.0.s8 %v354
    %v356 = vlaneseq
    %v357 = vshrl.u32 %v356, 7
    %v358 = vsub.s32 %v355, %v357
    %v359 = vrot.slane %v351, %v358
    %v361 = vunpack.c.l.s4 1983009808
    %v362 = vunpack.c.0.s8 %v361
    %v363 = vlaneseq
    %v364 = vshrl.u32 %v363, 7
    %v365 = vsub.s32 %v362, %v364
    %v366 = vrot.slane %v352, %v365
    %v367 = vcombine.low %v169, %v181
    %v368 = vcombine.high %v169, %v181
    %v370 = vunpack.c.l.s4 1983009808
    %v371 = vunpack.c.0.s8 %v370
    %v372 = vlaneseq
    %v373 = vshrl.u32 %v372, 7
    %v374 = vsub.s32 %v371, %v373
    %v375 = vrot.slane %v367, %v374
    %v377 = vunpack.c.l.s4 1983009808
    %v378 = vunpack.c.0.s8 %v377
    %v379 = vlaneseq
    %v380 = vshrl.u32 %v379, 7
    %v381 = vsub.s32 %v378, %v380
    %v382 = vrot.slane %v368, %v381
    %v383 = vcombine.low %v327, %v343
    %v384 = vcombine.high %v327, %v343
    %v386 = vunpack.c.l.s4 1934713408
    %v387 = vunpack.c.0.s8 %v386
    %v388 = vlaneseq
    %v389 = vshrl.u32 %v388, 7
    %v390 = vsub.s32 %v387, %v389
    %v391 = vrot.slane %v383, %v390
    %v393 = vunpack.c.l.s4 1934713408
    %v394 = vunpack.c.0.s8 %v393
    %v395 = vlaneseq
    %v396 = vshrl.u32 %v395, 7
    %v397 = vsub.s32 %v394, %v396
    %v398 = vrot.slane %v384, %v397
    %v399 = vcombine.low %v334, %v350
    %v400 = vcombine.high %v334, %v350
    %v402 = vunpack.c.l.s4 1934713408
    %v403 = vunpack.c.0.s8 %v402
    %v404 = vlaneseq
    %v405 = vshrl.u32 %v404, 7
    %v406 = vsub.s32 %v403, %v405
    %v407 = vrot.slane %v399, %v406
    %v409 = vunpack.c.l.s4 1934713408
    %v410 = vunpack.c.0.s8 %v409
    %v411 = vlaneseq
    %v412 = vshrl.u32 %v411, 7
    %v413 = vsub.s32 %v410, %v412
    %v414 = vrot.slane %v400, %v413
    %v415 = vcombine.low %v359, %v375
    %v416 = vcombine.high %v359, %v375
    %v418 = vunpack.c.l.s4 1934713408
    %v419 = vunpack.c.0.s8 %v418
    %v420 = vlaneseq
    %v421 = vshrl.u32 %v420, 7
    %v422 = vsub.s32 %v419, %v421
    %v423 = vrot.slane %v415, %v422
    %v425 = vunpack.c.l.s4 1934713408
    %v426 = vunpack.c.0.s8 %v425
    %v427 = vlaneseq
    %v428 = vshrl.u32 %v427, 7
    %v429 = vsub.s32 %v426, %v428
    %v430 = vrot.slane %v416, %v429
    %v431 = vcombine.low %v366, %v382
    %v432 = vcombine.high %v366, %v382
    %v434 = vunpack.c.l.s4 1934713408
    %v435 = vunpack.c.0.s8 %v434
    %v436 = vlaneseq
    %v437 = vshrl.u32 %v436, 7
    %v438 = vsub.s32 %v435, %v437
    %v439 = vrot.slane %v431, %v438
    %v441 = vunpack.c.l.s4 1934713408
    %v442 = vunpack.c.0.s8 %v441
    %v443 = vlaneseq
    %v444 = vshrl.u32 %v443, 7
    %v445 = vsub.s32 %v442, %v444
    %v446 = vrot.slane %v432, %v445
    %v447 = vcombine.low %v391, %v423
    %v448 = vcombine.high %v391, %v423
    %v449 = vcombine.low %v398, %v430
    %v450 = vcombine.high %v398, %v430
    %v451 = vcombine.low %v407, %v439
    %v452 = vcombine.high %v407, %v439
    %v453 = vcombine.low %v414, %v446
    %v454 = vcombine.high %v414, %v446
    %455 = vst [vmem:[#allocation2] sm:$0xff] %v311
    %456 = vst [vmem:[#allocation2 + $0x8] sm:$0xff] %v447
    %457 = vst [vmem:[#allocation2 + $0x10] sm:$0xff] %v312
    %458 = vst [vmem:[#allocation2 + $0x18] sm:$0xff] %v448
    %459 = vst [vmem:[#allocation2 + $0x20] sm:$0xff] %v313
    %460 = vst [vmem:[#allocation2 + $0x28] sm:$0xff] %v449
    %461 = vst [vmem:[#allocation2 + $0x30] sm:$0xff] %v314
    %462 = vst [vmem:[#allocation2 + $0x38] sm:$0xff] %v450
    %463 = vst [vmem:[#allocation2 + $0x40] sm:$0xff] %v315
    %464 = vst [vmem:[#allocation2 + $0x48] sm:$0xff] %v451
    %465 = vst [vmem:[#allocation2 + $0x50] sm:$0xff] %v316
    %466 = vst [vmem:[#allocation2 + $0x58] sm:$0xff] %v452
    %467 = vst [vmem:[#allocation2 + $0x60] sm:$0xff] %v317
    %468 = vst [vmem:[#allocation2 + $0x68] sm:$0xff] %v453
    %469 = vst [vmem:[#allocation2 + $0x70] sm:$0xff] %v318
    %470 = vst [vmem:[#allocation2 + $0x78] sm:$0xff] %v454
    %v471 = vld [vmem:[%s2] sm:$0xff]
    %v472 = vld [vmem:[%s2 + $0x8] sm:$0xff]
    %v473 = vld [vmem:[%s2 + $0x10] sm:$0xff]
    %v474 = vld [vmem:[%s2 + $0x18] sm:$0xff]
    %v475 = vld [vmem:[%s2 + $0x20] sm:$0xff]
    %v476 = vld [vmem:[%s2 + $0x28] sm:$0xff]
    %v477 = vld [vmem:[%s2 + $0x30] sm:$0xff]
    %v478 = vld [vmem:[%s2 + $0x38] sm:$0xff]
    %v479 = vld [vmem:[%s2 + $0x40] sm:$0xff]
    %v480 = vld [vmem:[%s2 + $0x48] sm:$0xff]
    %v481 = vld [vmem:[%s2 + $0x50] sm:$0xff]
    %v482 = vld [vmem:[%s2 + $0x58] sm:$0xff]
    %v483 = vld [vmem:[%s2 + $0x60] sm:$0xff]
    %v484 = vld [vmem:[%s2 + $0x68] sm:$0xff]
    %v485 = vld [vmem:[%s2 + $0x70] sm:$0xff]
    %v486 = vld [vmem:[%s2 + $0x78] sm:$0xff]
    %v487 = vld [vmem:[%s3] sm:$0x3]
    %v488 = vld [vmem:[#allocation2] sm:$0xff]
    %v489 = vld [vmem:[#allocation2 + $0x8] sm:$0xff]
    %v490 = vxor.u32 %v488, 2147483648
    %v491 = vxor.u32 %v489, 2147483648
    %v492 = vmul.f32 %v490, 1.442695
    %v493 = vpow.pop %v492
    %v494 = vmul.f32 %v491, 1.442695
    %v495 = vpow.pop %v494
    %v496 = vadd.f32 %v493, 1.0
    %v497 = vadd.f32 %v495, 1.0
    %v498 = vrcp.pop %v496
    %v499 = vmul.f32 1.0, %v498
    %v500 = vrcp.pop %v497
    %v501 = vmul.f32 1.0, %v500
    %v502 = vmul.f32 %v501, 2.0
    %v503 = vsub.f32 %v502, 1.0
    %v504 = vmul.f32 %v499, %v503
    %v505 = vtanh.pop %v504
    %507 = vrot.lane.b32.xlu0 %v505, 64
    %v508 = vpop.permute.xlu0 %507
    %v510 = vmul.f32 %v501, %v508
    %v511 = vlaneseq
    %v512 = vand.u32 %v511, 127
    %vm513 = vcmp.lt.s32.totalorder %v512, 32
    %515 = vrot.lane.b32.xlu0 %v510, 64
    %v516 = vpop.permute.xlu0 %515
    %v518 = vsel %vm513, %v516, 0.0
    %v519 = vsel %vm513, %v504, 0.0
    %s520 = scalar_lea.vmem [#allocation2], 16
    %v521 = vld [vmem:[%s520] sm:$0xff]
    %v522 = vld [vmem:[%s520 + $0x8] sm:$0xff]
    %vm523 = vcmask 523264
    %v525 = vsel %vm523, %v518, 0
    %527 = vmatprep.subr.mxu0 0.0
    %528 = vmatpush1.msra.mxu0 0.0
    %529 = vmatprep.subr.mxu0 0.0
    %530 = vmatpush1.msra.mxu0 0.0
    %531 = vmatprep.subr.mxu0 0.0
    %532 = vmatpush1.msra.mxu0 0.0
    %533 = vmatprep.subr.mxu0 0.0
    %534 = vmatpush1.msra.mxu0 0.0
    %535 = vmatprep.subr.mxu0 0.0
    %536 = vmatpush1.msra.mxu0 0.0
    %537 = vmatprep.subr.mxu0 0.0
    %538 = vmatpush1.msra.mxu0 0.0
    %539 = vmatprep.subr.mxu0 0.0
    %540 = vmatpush1.msra.mxu0 0.0
    %541 = vmatprep.subr.mxu0 0.0
    %542 = vmatpush1.msra.mxu0 0.0
    %543 = vmatprep.subr.mxu0 %v486
    %544 = vmatpush1.msra.mxu0 %v485
    %545 = vmatprep.subr.mxu0 %v484
    %546 = vmatpush1.msra.mxu0 %v483
    %547 = vmatprep.subr.mxu0 %v482
    %548 = vmatpush1.msra.mxu0 %v481
    %549 = vmatprep.subr.mxu0 %v480
    %550 = vmatpush1.msra.mxu0 %v479
    %551 = vmatprep.subr.mxu0 %v478
    %552 = vmatpush1.msra.mxu0 %v477
    %553 = vmatprep.subr.mxu0 %v476
    %554 = vmatpush1.msra.mxu0 %v475
    %555 = vmatprep.subr.mxu0 %v474
    %556 = vmatpush1.msra.mxu0 %v473
    %557 = vmatprep.subr.mxu0 %v472
    %558 = vmatpush1.msra.mxu0 %v471
    %559 = vmatprep.subr.mxu0 0.0
    %560 = vmatpush2.msra.mxu0 0.0
    %561 = vmatprep.subr.mxu0 0.0
    %562 = vmatpush2.msra.mxu0 0.0
    %563 = vmatprep.subr.mxu0 0.0
    %564 = vmatpush2.msra.mxu0 0.0
    %565 = vmatprep.subr.mxu0 0.0
    %566 = vmatpush2.msra.mxu0 0.0
    %567 = vmatprep.subr.mxu0 0.0
    %568 = vmatpush2.msra.mxu0 0.0
    %569 = vmatprep.subr.mxu0 0.0
    %570 = vmatpush2.msra.mxu0 0.0
    %571 = vmatprep.subr.mxu0 0.0
    %572 = vmatpush2.msra.mxu0 0.0
    %573 = vmatprep.subr.mxu0 0.0
    %574 = vmatpush2.msra.mxu0 0.0
    %575 = vmatprep.subr.mxu0 0.0
    %576 = vmatpush2.msra.mxu0 0.0
    %577 = vmatprep.subr.mxu0 0.0
    %578 = vmatpush2.msra.mxu0 0.0
    %579 = vmatprep.subr.mxu0 0.0
    %580 = vmatpush2.msra.mxu0 0.0
    %581 = vmatprep.subr.mxu0 0.0
    %582 = vmatpush2.msra.mxu0 0.0
    %583 = vmatprep.subr.mxu0 0.0
    %584 = vmatpush2.msra.mxu0 0.0
    %585 = vmatprep.subr.mxu0 0.0
    %586 = vmatpush2.msra.mxu0 0.0
    %587 = vmatprep.subr.mxu0 0.0
    %588 = vmatpush2.msra.mxu0 0.0
    %589 = vmatprep.subr.mxu0 0.0
    %590 = vmatpush2.msra.mxu0 0.0
    %591 = vmatprep.mubr.f32.mxu0 0.0
    %592 = vmatmul.mubr.f32.gmra.mxu0 %v525
    %v593 = vpop.f32.mrf.mxu0
    %v594 = vadd.f32 %v521, %v593
    %v595 = vpop.f32.mrf.mxu0
    %v596 = vadd.f32 %v522, %v595
    %597 = vdwg.mxu0
    %v598 = vxor.u32 %v594, 2147483648
    %v599 = vxor.u32 %v596, 2147483648
    %v600 = vmul.f32 %v598, 1.442695
    %v601 = vpow.pop %v600
    %v602 = vmul.f32 %v599, 1.442695
    %v603 = vpow.pop %v602
    %v604 = vadd.f32 %v601, 1.0
    %v605 = vadd.f32 %v603, 1.0
    %v606 = vrcp.pop %v604
    %v607 = vmul.f32 1.0, %v606
    %v608 = vrcp.pop %v605
    %v609 = vmul.f32 1.0, %v608
    %v610 = vmul.f32 %v609, 2.0
    %v611 = vsub.f32 %v610, 1.0
    %613 = vrot.lane.b32.xlu0 %v519, 64
    %v614 = vpop.permute.xlu0 %613
    %v616 = vmul.f32 %v607, %v614
    %v617 = vmul.f32 %v607, %v611
    %619 = vrot.lane.b32.xlu0 %v617, 64
    %v620 = vpop.permute.xlu0 %619
    %v622 = vadd.f32 %v616, %v620
    %v623 = vtanh.pop %v622
    %v624 = vmul.f32 %v609, %v623
    %s625 = scalar_lea.vmem [#allocation2], 32
    %v626 = vld [vmem:[%s625] sm:$0xff]
    %v627 = vld [vmem:[%s625 + $0x8] sm:$0xff]
    %629 = vrot.lane.b32.xlu0 %v624, 64
    %v630 = vpop.permute.xlu0 %629
    %v631 = vsel %vm523, %v630, 0
    %633 = vmatprep.subr.mxu0 0.0
    %634 = vmatpush1.msra.mxu0 0.0
    %635 = vmatprep.subr.mxu0 0.0
    %636 = vmatpush1.msra.mxu0 0.0
    %637 = vmatprep.subr.mxu0 0.0
    %638 = vmatpush1.msra.mxu0 0.0
    %639 = vmatprep.subr.mxu0 0.0
    %640 = vmatpush1.msra.mxu0 0.0
    %641 = vmatprep.subr.mxu0 0.0
    %642 = vmatpush1.msra.mxu0 0.0
    %643 = vmatprep.subr.mxu0 0.0
    %644 = vmatpush1.msra.mxu0 0.0
    %645 = vmatprep.subr.mxu0 0.0
    %646 = vmatpush1.msra.mxu0 0.0
    %647 = vmatprep.subr.mxu0 0.0
    %648 = vmatpush1.msra.mxu0 0.0
    %649 = vmatprep.subr.mxu0 %v486
    %650 = vmatpush1.msra.mxu0 %v485
    %651 = vmatprep.subr.mxu0 %v484
    %652 = vmatpush1.msra.mxu0 %v483
    %653 = vmatprep.subr.mxu0 %v482
    %654 = vmatpush1.msra.mxu0 %v481
    %655 = vmatprep.subr.mxu0 %v480
    %656 = vmatpush1.msra.mxu0 %v479
    %657 = vmatprep.subr.mxu0 %v478
    %658 = vmatpush1.msra.mxu0 %v477
    %659 = vmatprep.subr.mxu0 %v476
    %660 = vmatpush1.msra.mxu0 %v475
    %661 = vmatprep.subr.mxu0 %v474
    %662 = vmatpush1.msra.mxu0 %v473
    %663 = vmatprep.subr.mxu0 %v472
    %664 = vmatpush1.msra.mxu0 %v471
    %665 = vmatprep.subr.mxu0 0.0
    %666 = vmatpush2.msra.mxu0 0.0
    %667 = vmatprep.subr.mxu0 0.0
    %668 = vmatpush2.msra.mxu0 0.0
    %669 = vmatprep.subr.mxu0 0.0
    %670 = vmatpush2.msra.mxu0 0.0
    %671 = vmatprep.subr.mxu0 0.0
    %672 = vmatpush2.msra.mxu0 0.0
    %673 = vmatprep.subr.mxu0 0.0
    %674 = vmatpush2.msra.mxu0 0.0
    %675 = vmatprep.subr.mxu0 0.0
    %676 = vmatpush2.msra.mxu0 0.0
    %677 = vmatprep.subr.mxu0 0.0
    %678 = vmatpush2.msra.mxu0 0.0
    %679 = vmatprep.subr.mxu0 0.0
    %680 = vmatpush2.msra.mxu0 0.0
    %681 = vmatprep.subr.mxu0 0.0
    %682 = vmatpush2.msra.mxu0 0.0
    %683 = vmatprep.subr.mxu0 0.0
    %684 = vmatpush2.msra.mxu0 0.0
    %685 = vmatprep.subr.mxu0 0.0
    %686 = vmatpush2.msra.mxu0 0.0
    %687 = vmatprep.subr.mxu0 0.0
    %688 = vmatpush2.msra.mxu0 0.0
    %689 = vmatprep.subr.mxu0 0.0
    %690 = vmatpush2.msra.mxu0 0.0
    %691 = vmatprep.subr.mxu0 0.0
    %692 = vmatpush2.msra.mxu0 0.0
    %693 = vmatprep.subr.mxu0 0.0
    %694 = vmatpush2.msra.mxu0 0.0
    %695 = vmatprep.subr.mxu0 0.0
    %696 = vmatpush2.msra.mxu0 0.0
    %697 = vmatprep.mubr.f32.mxu0 0.0
    %698 = vmatmul.mubr.f32.gmra.mxu0 %v631
    %v699 = vpop.f32.mrf.mxu0
    %v700 = vadd.f32 %v626, %v699
    %v701 = vpop.f32.mrf.mxu0
    %v702 = vadd.f32 %v627, %v701
    %703 = vdwg.mxu0
    %v704 = vxor.u32 %v700, 2147483648
    %v705 = vxor.u32 %v702, 2147483648
    %v706 = vmul.f32 %v704, 1.442695
    %v707 = vpow.pop %v706
    %v708 = vmul.f32 %v705, 1.442695
    %v709 = vpow.pop %v708
    %v710 = vadd.f32 %v707, 1.0
    %v711 = vadd.f32 %v709, 1.0
    %v712 = vrcp.pop %v710
    %v713 = vmul.f32 1.0, %v712
    %v714 = vrcp.pop %v711
    %v715 = vmul.f32 1.0, %v714
    %v716 = vmul.f32 %v715, 2.0
    %v717 = vsub.f32 %v716, 1.0
    %v718 = vmul.f32 %v713, %v622
    %v719 = vmul.f32 %v713, %v717
    %721 = vrot.lane.b32.xlu0 %v719, 64
    %v722 = vpop.permute.xlu0 %721
    %v724 = vadd.f32 %v718, %v722
    %v725 = vtanh.pop %v724
    %v726 = vmul.f32 %v715, %v725
    %s727 = scalar_lea.vmem [#allocation2], 48
    %v728 = vld [vmem:[%s727] sm:$0xff]
    %v729 = vld [vmem:[%s727 + $0x8] sm:$0xff]
    %731 = vrot.lane.b32.xlu0 %v726, 64
    %v732 = vpop.permute.xlu0 %731
    %v733 = vsel %vm523, %v732, 0
    %735 = vmatprep.subr.mxu0 0.0
    %736 = vmatpush1.msra.mxu0 0.0
    %737 = vmatprep.subr.mxu0 0.0
    %738 = vmatpush1.msra.mxu0 0.0
    %739 = vmatprep.subr.mxu0 0.0
    %740 = vmatpush1.msra.mxu0 0.0
    %741 = vmatprep.subr.mxu0 0.0
    %742 = vmatpush1.msra.mxu0 0.0
    %743 = vmatprep.subr.mxu0 0.0
    %744 = vmatpush1.msra.mxu0 0.0
    %745 = vmatprep.subr.mxu0 0.0
    %746 = vmatpush1.msra.mxu0 0.0
    %747 = vmatprep.subr.mxu0 0.0
    %748 = vmatpush1.msra.mxu0 0.0
    %749 = vmatprep.subr.mxu0 0.0
    %750 = vmatpush1.msra.mxu0 0.0
    %751 = vmatprep.subr.mxu0 %v486
    %752 = vmatpush1.msra.mxu0 %v485
    %753 = vmatprep.subr.mxu0 %v484
    %754 = vmatpush1.msra.mxu0 %v483
    %755 = vmatprep.subr.mxu0 %v482
    %756 = vmatpush1.msra.mxu0 %v481
    %757 = vmatprep.subr.mxu0 %v480
    %758 = vmatpush1.msra.mxu0 %v479
    %759 = vmatprep.subr.mxu0 %v478
    %760 = vmatpush1.msra.mxu0 %v477
    %761 = vmatprep.subr.mxu0 %v476
    %762 = vmatpush1.msra.mxu0 %v475
    %763 = vmatprep.subr.mxu0 %v474
    %764 = vmatpush1.msra.mxu0 %v473
    %765 = vmatprep.subr.mxu0 %v472
    %766 = vmatpush1.msra.mxu0 %v471
    %767 = vmatprep.subr.mxu0 0.0
    %768 = vmatpush2.msra.mxu0 0.0
    %769 = vmatprep.subr.mxu0 0.0
    %770 = vmatpush2.msra.mxu0 0.0
    %771 = vmatprep.subr.mxu0 0.0
    %772 = vmatpush2.msra.mxu0 0.0
    %773 = vmatprep.subr.mxu0 0.0
    %774 = vmatpush2.msra.mxu0 0.0
    %775 = vmatprep.subr.mxu0 0.0
    %776 = vmatpush2.msra.mxu0 0.0
    %777 = vmatprep.subr.mxu0 0.0
    %778 = vmatpush2.msra.mxu0 0.0
    %779 = vmatprep.subr.mxu0 0.0
    %780 = vmatpush2.msra.mxu0 0.0
    %781 = vmatprep.subr.mxu0 0.0
    %782 = vmatpush2.msra.mxu0 0.0
    %783 = vmatprep.subr.mxu0 0.0
    %784 = vmatpush2.msra.mxu0 0.0
    %785 = vmatprep.subr.mxu0 0.0
    %786 = vmatpush2.msra.mxu0 0.0
    %787 = vmatprep.subr.mxu0 0.0
    %788 = vmatpush2.msra.mxu0 0.0
    %789 = vmatprep.subr.mxu0 0.0
    %790 = vmatpush2.msra.mxu0 0.0
    %791 = vmatprep.subr.mxu0 0.0
    %792 = vmatpush2.msra.mxu0 0.0
    %793 = vmatprep.subr.mxu0 0.0
    %794 = vmatpush2.msra.mxu0 0.0
    %795 = vmatprep.subr.mxu0 0.0
    %796 = vmatpush2.msra.mxu0 0.0
    %797 = vmatprep.subr.mxu0 0.0
    %798 = vmatpush2.msra.mxu0 0.0
    %799 = vmatprep.mubr.f32.mxu0 0.0
    %800 = vmatmul.mubr.f32.gmra.mxu0 %v733
    %v801 = vpop.f32.mrf.mxu0
    %v802 = vadd.f32 %v728, %v801
    %v803 = vpop.f32.mrf.mxu0
    %v804 = vadd.f32 %v729, %v803
    %805 = vdwg.mxu0
    %v806 = vxor.u32 %v802, 2147483648
    %v807 = vxor.u32 %v804, 2147483648
    %v808 = vmul.f32 %v806, 1.442695
    %v809 = vpow.pop %v808
    %v810 = vmul.f32 %v807, 1.442695
    %v811 = vpow.pop %v810
    %v812 = vadd.f32 %v809, 1.0
    %v813 = vadd.f32 %v811, 1.0
    %v814 = vrcp.pop %v812
    %v815 = vmul.f32 1.0, %v814
    %v816 = vrcp.pop %v813
    %v817 = vmul.f32 1.0, %v816
    %v818 = vmul.f32 %v817, 2.0
    %v819 = vsub.f32 %v818, 1.0
    %v820 = vmul.f32 %v815, %v724
    %v821 = vmul.f32 %v815, %v819
    %823 = vrot.lane.b32.xlu0 %v821, 64
    %v824 = vpop.permute.xlu0 %823
    %v826 = vadd.f32 %v820, %v824
    %v827 = vtanh.pop %v826
    %v828 = vmul.f32 %v817, %v827
    %s829 = scalar_lea.vmem [#allocation2], 64
    %v830 = vld [vmem:[%s829] sm:$0xff]
    %v831 = vld [vmem:[%s829 + $0x8] sm:$0xff]
    %833 = vrot.lane.b32.xlu0 %v828, 64
    %v834 = vpop.permute.xlu0 %833
    %v835 = vsel %vm523, %v834, 0
    %837 = vmatprep.subr.mxu0 0.0
    %838 = vmatpush1.msra.mxu0 0.0
    %839 = vmatprep.subr.mxu0 0.0
    %840 = vmatpush1.msra.mxu0 0.0
    %841 = vmatprep.subr.mxu0 0.0
    %842 = vmatpush1.msra.mxu0 0.0
    %843 = vmatprep.subr.mxu0 0.0
    %844 = vmatpush1.msra.mxu0 0.0
    %845 = vmatprep.subr.mxu0 0.0
    %846 = vmatpush1.msra.mxu0 0.0
    %847 = vmatprep.subr.mxu0 0.0
    %848 = vmatpush1.msra.mxu0 0.0
    %849 = vmatprep.subr.mxu0 0.0
    %850 = vmatpush1.msra.mxu0 0.0
    %851 = vmatprep.subr.mxu0 0.0
    %852 = vmatpush1.msra.mxu0 0.0
    %853 = vmatprep.subr.mxu0 %v486
    %854 = vmatpush1.msra.mxu0 %v485
    %855 = vmatprep.subr.mxu0 %v484
    %856 = vmatpush1.msra.mxu0 %v483
    %857 = vmatprep.subr.mxu0 %v482
    %858 = vmatpush1.msra.mxu0 %v481
    %859 = vmatprep.subr.mxu0 %v480
    %860 = vmatpush1.msra.mxu0 %v479
    %861 = vmatprep.subr.mxu0 %v478
    %862 = vmatpush1.msra.mxu0 %v477
    %863 = vmatprep.subr.mxu0 %v476
    %864 = vmatpush1.msra.mxu0 %v475
    %865 = vmatprep.subr.mxu0 %v474
    %866 = vmatpush1.msra.mxu0 %v473
    %867 = vmatprep.subr.mxu0 %v472
    %868 = vmatpush1.msra.mxu0 %v471
    %869 = vmatprep.subr.mxu0 0.0
    %870 = vmatpush2.msra.mxu0 0.0
    %871 = vmatprep.subr.mxu0 0.0
    %872 = vmatpush2.msra.mxu0 0.0
    %873 = vmatprep.subr.mxu0 0.0
    %874 = vmatpush2.msra.mxu0 0.0
    %875 = vmatprep.subr.mxu0 0.0
    %876 = vmatpush2.msra.mxu0 0.0
    %877 = vmatprep.subr.mxu0 0.0
    %878 = vmatpush2.msra.mxu0 0.0
    %879 = vmatprep.subr.mxu0 0.0
    %880 = vmatpush2.msra.mxu0 0.0
    %881 = vmatprep.subr.mxu0 0.0
    %882 = vmatpush2.msra.mxu0 0.0
    %883 = vmatprep.subr.mxu0 0.0
    %884 = vmatpush2.msra.mxu0 0.0
    %885 = vmatprep.subr.mxu0 0.0
    %886 = vmatpush2.msra.mxu0 0.0
    %887 = vmatprep.subr.mxu0 0.0
    %888 = vmatpush2.msra.mxu0 0.0
    %889 = vmatprep.subr.mxu0 0.0
    %890 = vmatpush2.msra.mxu0 0.0
    %891 = vmatprep.subr.mxu0 0.0
    %892 = vmatpush2.msra.mxu0 0.0
    %893 = vmatprep.subr.mxu0 0.0
    %894 = vmatpush2.msra.mxu0 0.0
    %895 = vmatprep.subr.mxu0 0.0
    %896 = vmatpush2.msra.mxu0 0.0
    %897 = vmatprep.subr.mxu0 0.0
    %898 = vmatpush2.msra.mxu0 0.0
    %899 = vmatprep.subr.mxu0 0.0
    %900 = vmatpush2.msra.mxu0 0.0
    %901 = vmatprep.mubr.f32.mxu0 0.0
    %902 = vmatmul.mubr.f32.gmra.mxu0 %v835
    %v903 = vpop.f32.mrf.mxu0
    %v904 = vadd.f32 %v830, %v903
    %v905 = vpop.f32.mrf.mxu0
    %v906 = vadd.f32 %v831, %v905
    %907 = vdwg.mxu0
    %v908 = vxor.u32 %v904, 2147483648
    %v909 = vxor.u32 %v906, 2147483648
    %v910 = vmul.f32 %v908, 1.442695
    %v911 = vpow.pop %v910
    %v912 = vmul.f32 %v909, 1.442695
    %v913 = vpow.pop %v912
    %v914 = vadd.f32 %v911, 1.0
    %v915 = vadd.f32 %v913, 1.0
    %v916 = vrcp.pop %v914
    %v917 = vmul.f32 1.0, %v916
    %v918 = vrcp.pop %v915
    %v919 = vmul.f32 1.0, %v918
    %v920 = vmul.f32 %v919, 2.0
    %v921 = vsub.f32 %v920, 1.0
    %v922 = vmul.f32 %v917, %v826
    %v923 = vmul.f32 %v917, %v921
    %925 = vrot.lane.b32.xlu0 %v923, 64
    %v926 = vpop.permute.xlu0 %925
    %v928 = vadd.f32 %v922, %v926
    %v929 = vtanh.pop %v928
    %v930 = vmul.f32 %v919, %v929
    %s931 = scalar_lea.vmem [#allocation2], 80
    %v932 = vld [vmem:[%s931] sm:$0xff]
    %v933 = vld [vmem:[%s931 + $0x8] sm:$0xff]
    %935 = vrot.lane.b32.xlu0 %v930, 64
    %v936 = vpop.permute.xlu0 %935
    %v937 = vsel %vm523, %v936, 0
    %939 = vmatprep.subr.mxu0 0.0
    %940 = vmatpush1.msra.mxu0 0.0
    %941 = vmatprep.subr.mxu0 0.0
    %942 = vmatpush1.msra.mxu0 0.0
    %943 = vmatprep.subr.mxu0 0.0
    %944 = vmatpush1.msra.mxu0 0.0
    %945 = vmatprep.subr.mxu0 0.0
    %946 = vmatpush1.msra.mxu0 0.0
    %947 = vmatprep.subr.mxu0 0.0
    %948 = vmatpush1.msra.mxu0 0.0
    %949 = vmatprep.subr.mxu0 0.0
    %950 = vmatpush1.msra.mxu0 0.0
    %951 = vmatprep.subr.mxu0 0.0
    %952 = vmatpush1.msra.mxu0 0.0
    %953 = vmatprep.subr.mxu0 0.0
    %954 = vmatpush1.msra.mxu0 0.0
    %955 = vmatprep.subr.mxu0 %v486
    %956 = vmatpush1.msra.mxu0 %v485
    %957 = vmatprep.subr.mxu0 %v484
    %958 = vmatpush1.msra.mxu0 %v483
    %959 = vmatprep.subr.mxu0 %v482
    %960 = vmatpush1.msra.mxu0 %v481
    %961 = vmatprep.subr.mxu0 %v480
    %962 = vmatpush1.msra.mxu0 %v479
    %963 = vmatprep.subr.mxu0 %v478
    %964 = vmatpush1.msra.mxu0 %v477
    %965 = vmatprep.subr.mxu0 %v476
    %966 = vmatpush1.msra.mxu0 %v475
    %967 = vmatprep.subr.mxu0 %v474
    %968 = vmatpush1.msra.mxu0 %v473
    %969 = vmatprep.subr.mxu0 %v472
    %970 = vmatpush1.msra.mxu0 %v471
    %971 = vmatprep.subr.mxu0 0.0
    %972 = vmatpush2.msra.mxu0 0.0
    %973 = vmatprep.subr.mxu0 0.0
    %974 = vmatpush2.msra.mxu0 0.0
    %975 = vmatprep.subr.mxu0 0.0
    %976 = vmatpush2.msra.mxu0 0.0
    %977 = vmatprep.subr.mxu0 0.0
    %978 = vmatpush2.msra.mxu0 0.0
    %979 = vmatprep.subr.mxu0 0.0
    %980 = vmatpush2.msra.mxu0 0.0
    %981 = vmatprep.subr.mxu0 0.0
    %982 = vmatpush2.msra.mxu0 0.0
    %983 = vmatprep.subr.mxu0 0.0
    %984 = vmatpush2.msra.mxu0 0.0
    %985 = vmatprep.subr.mxu0 0.0
    %986 = vmatpush2.msra.mxu0 0.0
    %987 = vmatprep.subr.mxu0 0.0
    %988 = vmatpush2.msra.mxu0 0.0
    %989 = vmatprep.subr.mxu0 0.0
    %990 = vmatpush2.msra.mxu0 0.0
    %991 = vmatprep.subr.mxu0 0.0
    %992 = vmatpush2.msra.mxu0 0.0
    %993 = vmatprep.subr.mxu0 0.0
    %994 = vmatpush2.msra.mxu0 0.0
    %995 = vmatprep.subr.mxu0 0.0
    %996 = vmatpush2.msra.mxu0 0.0
    %997 = vmatprep.subr.mxu0 0.0
    %998 = vmatpush2.msra.mxu0 0.0
    %999 = vmatprep.subr.mxu0 0.0
    %1000 = vmatpush2.msra.mxu0 0.0
    %1001 = vmatprep.subr.mxu0 0.0
    %1002 = vmatpush2.msra.mxu0 0.0
    %1003 = vmatprep.mubr.f32.mxu0 0.0
    %1004 = vmatmul.mubr.f32.gmra.mxu0 %v937
    %v1005 = vpop.f32.mrf.mxu0
    %v1006 = vadd.f32 %v932, %v1005
    %v1007 = vpop.f32.mrf.mxu0
    %v1008 = vadd.f32 %v933, %v1007
    %1009 = vdwg.mxu0
    %v1010 = vxor.u32 %v1006, 2147483648
    %v1011 = vxor.u32 %v1008, 2147483648
    %v1012 = vmul.f32 %v1010, 1.442695
    %v1013 = vpow.pop %v1012
    %v1014 = vmul.f32 %v1011, 1.442695
    %v1015 = vpow.pop %v1014
    %v1016 = vadd.f32 %v1013, 1.0
    %v1017 = vadd.f32 %v1015, 1.0
    %v1018 = vrcp.pop %v1016
    %v1019 = vmul.f32 1.0, %v1018
    %v1020 = vrcp.pop %v1017
    %v1021 = vmul.f32 1.0, %v1020
    %v1022 = vmul.f32 %v1021, 2.0
    %v1023 = vsub.f32 %v1022, 1.0
    %v1024 = vmul.f32 %v1019, %v928
    %v1025 = vmul.f32 %v1019, %v1023
    %1027 = vrot.lane.b32.xlu0 %v1025, 64
    %v1028 = vpop.permute.xlu0 %1027
    %v1030 = vadd.f32 %v1024, %v1028
    %v1031 = vtanh.pop %v1030
    %v1032 = vmul.f32 %v1021, %v1031
    %s1033 = scalar_lea.vmem [#allocation2], 96
    %v1034 = vld [vmem:[%s1033] sm:$0xff]
    %v1035 = vld [vmem:[%s1033 + $0x8] sm:$0xff]
    %1037 = vrot.lane.b32.xlu0 %v1032, 64
    %v1038 = vpop.permute.xlu0 %1037
    %v1039 = vsel %vm523, %v1038, 0
    %1041 = vmatprep.subr.mxu0 0.0
    %1042 = vmatpush1.msra.mxu0 0.0
    %1043 = vmatprep.subr.mxu0 0.0
    %1044 = vmatpush1.msra.mxu0 0.0
    %1045 = vmatprep.subr.mxu0 0.0
    %1046 = vmatpush1.msra.mxu0 0.0
    %1047 = vmatprep.subr.mxu0 0.0
    %1048 = vmatpush1.msra.mxu0 0.0
    %1049 = vmatprep.subr.mxu0 0.0
    %1050 = vmatpush1.msra.mxu0 0.0
    %1051 = vmatprep.subr.mxu0 0.0
    %1052 = vmatpush1.msra.mxu0 0.0
    %1053 = vmatprep.subr.mxu0 0.0
    %1054 = vmatpush1.msra.mxu0 0.0
    %1055 = vmatprep.subr.mxu0 0.0
    %1056 = vmatpush1.msra.mxu0 0.0
    %1057 = vmatprep.subr.mxu0 %v486
    %1058 = vmatpush1.msra.mxu0 %v485
    %1059 = vmatprep.subr.mxu0 %v484
    %1060 = vmatpush1.msra.mxu0 %v483
    %1061 = vmatprep.subr.mxu0 %v482
    %1062 = vmatpush1.msra.mxu0 %v481
    %1063 = vmatprep.subr.mxu0 %v480
    %1064 = vmatpush1.msra.mxu0 %v479
    %1065 = vmatprep.subr.mxu0 %v478
    %1066 = vmatpush1.msra.mxu0 %v477
    %1067 = vmatprep.subr.mxu0 %v476
    %1068 = vmatpush1.msra.mxu0 %v475
    %1069 = vmatprep.subr.mxu0 %v474
    %1070 = vmatpush1.msra.mxu0 %v473
    %1071 = vmatprep.subr.mxu0 %v472
    %1072 = vmatpush1.msra.mxu0 %v471
    %1073 = vmatprep.subr.mxu0 0.0
    %1074 = vmatpush2.msra.mxu0 0.0
    %1075 = vmatprep.subr.mxu0 0.0
    %1076 = vmatpush2.msra.mxu0 0.0
    %1077 = vmatprep.subr.mxu0 0.0
    %1078 = vmatpush2.msra.mxu0 0.0
    %1079 = vmatprep.subr.mxu0 0.0
    %1080 = vmatpush2.msra.mxu0 0.0
    %1081 = vmatprep.subr.mxu0 0.0
    %1082 = vmatpush2.msra.mxu0 0.0
    %1083 = vmatprep.subr.mxu0 0.0
    %1084 = vmatpush2.msra.mxu0 0.0
    %1085 = vmatprep.subr.mxu0 0.0
    %1086 = vmatpush2.msra.mxu0 0.0
    %1087 = vmatprep.subr.mxu0 0.0
    %1088 = vmatpush2.msra.mxu0 0.0
    %1089 = vmatprep.subr.mxu0 0.0
    %1090 = vmatpush2.msra.mxu0 0.0
    %1091 = vmatprep.subr.mxu0 0.0
    %1092 = vmatpush2.msra.mxu0 0.0
    %1093 = vmatprep.subr.mxu0 0.0
    %1094 = vmatpush2.msra.mxu0 0.0
    %1095 = vmatprep.subr.mxu0 0.0
    %1096 = vmatpush2.msra.mxu0 0.0
    %1097 = vmatprep.subr.mxu0 0.0
    %1098 = vmatpush2.msra.mxu0 0.0
    %1099 = vmatprep.subr.mxu0 0.0
    %1100 = vmatpush2.msra.mxu0 0.0
    %1101 = vmatprep.subr.mxu0 0.0
    %1102 = vmatpush2.msra.mxu0 0.0
    %1103 = vmatprep.subr.mxu0 0.0
    %1104 = vmatpush2.msra.mxu0 0.0
    %1105 = vmatprep.mubr.f32.mxu0 0.0
    %1106 = vmatmul.mubr.f32.gmra.mxu0 %v1039
    %v1107 = vpop.f32.mrf.mxu0
    %v1108 = vadd.f32 %v1034, %v1107
    %v1109 = vpop.f32.mrf.mxu0
    %v1110 = vadd.f32 %v1035, %v1109
    %1111 = vdwg.mxu0
    %v1112 = vxor.u32 %v1108, 2147483648
    %v1113 = vxor.u32 %v1110, 2147483648
    %v1114 = vmul.f32 %v1112, 1.442695
    %v1115 = vpow.pop %v1114
    %v1116 = vmul.f32 %v1113, 1.442695
    %v1117 = vpow.pop %v1116
    %v1118 = vadd.f32 %v1115, 1.0
    %v1119 = vadd.f32 %v1117, 1.0
    %v1120 = vrcp.pop %v1118
    %v1121 = vmul.f32 1.0, %v1120
    %v1122 = vrcp.pop %v1119
    %v1123 = vmul.f32 1.0, %v1122
    %v1124 = vmul.f32 %v1123, 2.0
    %v1125 = vsub.f32 %v1124, 1.0
    %v1126 = vmul.f32 %v1121, %v1030
    %v1127 = vmul.f32 %v1121, %v1125
    %1129 = vrot.lane.b32.xlu0 %v1127, 64
    %v1130 = vpop.permute.xlu0 %1129
    %v1132 = vadd.f32 %v1126, %v1130
    %v1133 = vtanh.pop %v1132
    %v1134 = vmul.f32 %v1123, %v1133
    %s1135 = scalar_lea.vmem [#allocation2], 112
    %v1136 = vld [vmem:[%s1135] sm:$0xff]
    %v1137 = vld [vmem:[%s1135 + $0x8] sm:$0xff]
    %1139 = vrot.lane.b32.xlu0 %v1134, 64
    %v1140 = vpop.permute.xlu0 %1139
    %v1141 = vsel %vm523, %v1140, 0
    %1143 = vmatprep.subr.mxu0 0.0
    %1144 = vmatpush1.msra.mxu0 0.0
    %1145 = vmatprep.subr.mxu0 0.0
    %1146 = vmatpush1.msra.mxu0 0.0
    %1147 = vmatprep.subr.mxu0 0.0
    %1148 = vmatpush1.msra.mxu0 0.0
    %1149 = vmatprep.subr.mxu0 0.0
    %1150 = vmatpush1.msra.mxu0 0.0
    %1151 = vmatprep.subr.mxu0 0.0
    %1152 = vmatpush1.msra.mxu0 0.0
    %1153 = vmatprep.subr.mxu0 0.0
    %1154 = vmatpush1.msra.mxu0 0.0
    %1155 = vmatprep.subr.mxu0 0.0
    %1156 = vmatpush1.msra.mxu0 0.0
    %1157 = vmatprep.subr.mxu0 0.0
    %1158 = vmatpush1.msra.mxu0 0.0
    %1159 = vmatprep.subr.mxu0 %v486
    %1160 = vmatpush1.msra.mxu0 %v485
    %1161 = vmatprep.subr.mxu0 %v484
    %1162 = vmatpush1.msra.mxu0 %v483
    %1163 = vmatprep.subr.mxu0 %v482
    %1164 = vmatpush1.msra.mxu0 %v481
    %1165 = vmatprep.subr.mxu0 %v480
    %1166 = vmatpush1.msra.mxu0 %v479
    %1167 = vmatprep.subr.mxu0 %v478
    %1168 = vmatpush1.msra.mxu0 %v477
    %1169 = vmatprep.subr.mxu0 %v476
    %1170 = vmatpush1.msra.mxu0 %v475
    %1171 = vmatprep.subr.mxu0 %v474
    %1172 = vmatpush1.msra.mxu0 %v473
    %1173 = vmatprep.subr.mxu0 %v472
    %1174 = vmatpush1.msra.mxu0 %v471
    %1175 = vmatprep.subr.mxu0 0.0
    %1176 = vmatpush2.msra.mxu0 0.0
    %1177 = vmatprep.subr.mxu0 0.0
    %1178 = vmatpush2.msra.mxu0 0.0
    %1179 = vmatprep.subr.mxu0 0.0
    %1180 = vmatpush2.msra.mxu0 0.0
    %1181 = vmatprep.subr.mxu0 0.0
    %1182 = vmatpush2.msra.mxu0 0.0
    %1183 = vmatprep.subr.mxu0 0.0
    %1184 = vmatpush2.msra.mxu0 0.0
    %1185 = vmatprep.subr.mxu0 0.0
    %1186 = vmatpush2.msra.mxu0 0.0
    %1187 = vmatprep.subr.mxu0 0.0
    %1188 = vmatpush2.msra.mxu0 0.0
    %1189 = vmatprep.subr.mxu0 0.0
    %1190 = vmatpush2.msra.mxu0 0.0
    %1191 = vmatprep.subr.mxu0 0.0
    %1192 = vmatpush2.msra.mxu0 0.0
    %1193 = vmatprep.subr.mxu0 0.0
    %1194 = vmatpush2.msra.mxu0 0.0
    %1195 = vmatprep.subr.mxu0 0.0
    %1196 = vmatpush2.msra.mxu0 0.0
    %1197 = vmatprep.subr.mxu0 0.0
    %1198 = vmatpush2.msra.mxu0 0.0
    %1199 = vmatprep.subr.mxu0 0.0
    %1200 = vmatpush2.msra.mxu0 0.0
    %1201 = vmatprep.subr.mxu0 0.0
    %1202 = vmatpush2.msra.mxu0 0.0
    %1203 = vmatprep.subr.mxu0 0.0
    %1204 = vmatpush2.msra.mxu0 0.0
    %1205 = vmatprep.subr.mxu0 0.0
    %1206 = vmatpush2.msra.mxu0 0.0
    %1207 = vmatprep.mubr.f32.mxu0 0.0
    %1208 = vmatmul.mubr.f32.gmra.mxu0 %v1141
    %v1209 = vpop.f32.mrf.mxu0
    %v1210 = vadd.f32 %v1136, %v1209
    %v1211 = vpop.f32.mrf.mxu0
    %v1212 = vadd.f32 %v1137, %v1211
    %1213 = vdwg.mxu0
    %v1214 = vxor.u32 %v1210, 2147483648
    %v1215 = vxor.u32 %v1212, 2147483648
    %v1216 = vmul.f32 %v1214, 1.442695
    %v1217 = vpow.pop %v1216
    %v1218 = vmul.f32 %v1215, 1.442695
    %v1219 = vpow.pop %v1218
    %v1220 = vadd.f32 %v1217, 1.0
    %v1221 = vadd.f32 %v1219, 1.0
    %v1222 = vrcp.pop %v1220
    %v1223 = vmul.f32 1.0, %v1222
    %v1224 = vrcp.pop %v1221
    %v1225 = vmul.f32 1.0, %v1224
    %v1226 = vmul.f32 %v1225, 2.0
    %v1227 = vsub.f32 %v1226, 1.0
    %v1228 = vmul.f32 %v1223, %v1132
    %v1229 = vmul.f32 %v1223, %v1227
    %1231 = vrot.lane.b32.xlu0 %v1229, 64
    %v1232 = vpop.permute.xlu0 %1231
    %v1234 = vadd.f32 %v1228, %v1232
    %v1235 = vtanh.pop %v1234
    %v1236 = vmul.f32 %v1225, %v1235
    %v1238 = vlaneseq
    %v1239 = vshrl.u32 %v1238, 7
    %v1240 = vsub.s32 0, %v1239
    %v1241 = vrot.slane %v487, %v1240
    %v1242 = vlaneseq
    %v1243 = vshrl.u32 %v1242, 7
    %v1244 = vsub.s32 1, %v1243
    %v1245 = vrot.slane %v487, %v1244
    %1249 = vrot.lane.b32.xlu0 %v1236, 64
    %v1250 = vpop.permute.xlu0 %1249
    %v1251 = vsel %vm523, %v1250, 0
    %1253 = vmatprep.subr.mxu0 0.0
    %1254 = vmatpush1.msra.mxu0 0.0
    %1255 = vmatprep.subr.mxu0 0.0
    %1256 = vmatpush1.msra.mxu0 0.0
    %1257 = vmatprep.subr.mxu0 0.0
    %1258 = vmatpush1.msra.mxu0 0.0
    %1259 = vmatprep.subr.mxu0 0.0
    %1260 = vmatpush1.msra.mxu0 0.0
    %1261 = vmatprep.subr.mxu0 0.0
    %1262 = vmatpush1.msra.mxu0 0.0
    %1263 = vmatprep.subr.mxu0 0.0
    %1264 = vmatpush1.msra.mxu0 0.0
    %1265 = vmatprep.subr.mxu0 0.0
    %1266 = vmatpush1.msra.mxu0 0.0
    %1267 = vmatprep.subr.mxu0 0.0
    %1268 = vmatpush1.msra.mxu0 0.0
    %1269 = vmatprep.subr.mxu0 %v486
    %1270 = vmatpush1.msra.mxu0 %v485
    %1271 = vmatprep.subr.mxu0 %v484
    %1272 = vmatpush1.msra.mxu0 %v483
    %1273 = vmatprep.subr.mxu0 %v482
    %1274 = vmatpush1.msra.mxu0 %v481
    %1275 = vmatprep.subr.mxu0 %v480
    %1276 = vmatpush1.msra.mxu0 %v479
    %1277 = vmatprep.subr.mxu0 %v478
    %1278 = vmatpush1.msra.mxu0 %v477
    %1279 = vmatprep.subr.mxu0 %v476
    %1280 = vmatpush1.msra.mxu0 %v475
    %1281 = vmatprep.subr.mxu0 %v474
    %1282 = vmatpush1.msra.mxu0 %v473
    %1283 = vmatprep.subr.mxu0 %v472
    %1284 = vmatpush1.msra.mxu0 %v471
    %1285 = vmatprep.subr.mxu0 0.0
    %1286 = vmatpush2.msra.mxu0 0.0
    %1287 = vmatprep.subr.mxu0 0.0
    %1288 = vmatpush2.msra.mxu0 0.0
    %1289 = vmatprep.subr.mxu0 0.0
    %1290 = vmatpush2.msra.mxu0 0.0
    %1291 = vmatprep.subr.mxu0 0.0
    %1292 = vmatpush2.msra.mxu0 0.0
    %1293 = vmatprep.subr.mxu0 0.0
    %1294 = vmatpush2.msra.mxu0 0.0
    %1295 = vmatprep.subr.mxu0 0.0
    %1296 = vmatpush2.msra.mxu0 0.0
    %1297 = vmatprep.subr.mxu0 0.0
    %1298 = vmatpush2.msra.mxu0 0.0
    %1299 = vmatprep.subr.mxu0 0.0
    %1300 = vmatpush2.msra.mxu0 0.0
    %1301 = vmatprep.subr.mxu0 0.0
    %1302 = vmatpush2.msra.mxu0 0.0
    %1303 = vmatprep.subr.mxu0 0.0
    %1304 = vmatpush2.msra.mxu0 0.0
    %1305 = vmatprep.subr.mxu0 0.0
    %1306 = vmatpush2.msra.mxu0 0.0
    %1307 = vmatprep.subr.mxu0 0.0
    %1308 = vmatpush2.msra.mxu0 0.0
    %1309 = vmatprep.subr.mxu0 0.0
    %1310 = vmatpush2.msra.mxu0 0.0
    %1311 = vmatprep.subr.mxu0 0.0
    %1312 = vmatpush2.msra.mxu0 0.0
    %1313 = vmatprep.subr.mxu0 0.0
    %1314 = vmatpush2.msra.mxu0 0.0
    %1315 = vmatprep.subr.mxu0 0.0
    %1316 = vmatpush2.msra.mxu0 0.0
    %1317 = vmatprep.mubr.f32.mxu0 0.0
    %1318 = vmatmul.mubr.f32.gmra.mxu0 %v1251
    %v1319 = vpop.f32.mrf.mxu0
    %v1320 = vadd.f32 %v1241, %v1319
    %v1321 = vpop.f32.mrf.mxu0
    %v1322 = vadd.f32 %v1245, %v1321
    %1323 = vdwg.mxu0
    %v1324 = vxor.u32 %v1320, 2147483648
    %v1325 = vxor.u32 %v1322, 2147483648
    %v1326 = vmul.f32 %v1324, 1.442695
    %v1327 = vpow.pop %v1326
    %v1328 = vmul.f32 %v1325, 1.442695
    %v1329 = vpow.pop %v1328
    %v1330 = vadd.f32 %v1327, 1.0
    %v1331 = vadd.f32 %v1329, 1.0
    %v1332 = vrcp.pop %v1330
    %v1333 = vmul.f32 1.0, %v1332
    %v1334 = vrcp.pop %v1331
    %v1335 = vmul.f32 1.0, %v1334
    %v1336 = vmul.f32 %v1335, 2.0
    %v1337 = vsub.f32 %v1336, 1.0
    %v1338 = vmul.f32 %v1333, %v1234
    %v1339 = vmul.f32 %v1333, %v1337
    %1341 = vrot.lane.b32.xlu0 %v1339, 64
    %v1342 = vpop.permute.xlu0 %1341
    %v1344 = vadd.f32 %v1338, %v1342
    %v1345 = vtanh.pop %v1344
    %v1346 = vmul.f32 %v1335, %v1345
    %vm1348 = vcmask 261120
    %1349 = vst.msk [vmem:[#allocation3] sm:$0xff] %vm1348, %v1250
    %1351 = vrot.lane.b32.xlu0 %v1234, 64
    %v1352 = vpop.permute.xlu0 %1351
    %1354 = vst.msk [vmem:[#allocation5] sm:$0xff] %vm1348, %v1352
    %1356 = vrot.lane.b32.xlu0 %v1346, 32
    %v1357 = vpop.permute.xlu0 %1356
    %s1359 = scalar_lea.vmem [#allocation3], 8
    %1360 = vst.msk [vmem:[%s1359] sm:$0xff] %vm1348, %v1357
    %1362 = vrot.lane.b32.xlu0 %v1344, 32
    %v1363 = vpop.permute.xlu0 %1362
    %s1365 = scalar_lea.vmem [#allocation5], 8
    %1366 = vst.msk [vmem:[%s1365] sm:$0xff] %vm1348, %v1363
    // Predicated region
    $region18: #{encoder_forward.1} parent=1 // pred_check
      _
    $region19: #{encoder_forward.1} parent=1 // pred_check_branch
      %1368 = sbr.rel (0) target = $region21
    $region20: #{encoder_forward.1} parent=1 // pred_region
      %s1370 = ssub.s32 256, 256
      %1371 = vsyncadd [#allocation4], %s1370
      %s1372 = sshll.u32 [#allocation3], 4
      %s1373 = int_to_ptr.vmem [resolvable:$true] %s1372
      %1378 = dma.vmem_to_hbm [thread:$0]  %s1373, 256, %s4, [#allocation4], 128, 128, 8
    $region21: #{encoder_forward.1} parent=1 // pred_fallthru
      _
    // Predicated region
    $region22: #{encoder_forward.1} parent=1 // pred_check
      _
    $region23: #{encoder_forward.1} parent=1 // pred_check_branch
      %1380 = sbr.rel (0) target = $region25
    $region24: #{encoder_forward.1} parent=1 // pred_region
      %s1382 = ssub.s32 256, 256
      %1383 = vsyncadd [#allocation6], %s1382
      %s1384 = sshll.u32 [#allocation5], 4
      %s1385 = int_to_ptr.vmem [resolvable:$true] %s1384
      %1390 = dma.vmem_to_hbm [thread:$0]  %s1385, 256, %s5, [#allocation6], 128, 128, 8
    $region25: #{encoder_forward.1} parent=1 // pred_fallthru
      _
    // Predicated region
    $region26: #{encoder_forward.1} parent=1 // pred_check
      _
    $region27: #{encoder_forward.1} parent=1 // pred_check_branch
      %1392 = sbr.rel (0) target = $region29
    $region28: #{encoder_forward.1} parent=1 // pred_region
      %1393 = dma.done [#allocation4], 256
    $region29: #{encoder_forward.1} parent=1 // pred_fallthru
      _
    // Predicated region
    $region30: #{encoder_forward.1} parent=1 // pred_check
      _
    $region31: #{encoder_forward.1} parent=1 // pred_check_branch
      %1395 = sbr.rel (0) target = $region33
    $region32: #{encoder_forward.1} parent=1 // pred_region
      %1396 = dma.done [#allocation6], 256
    $region33: #{encoder_forward.1} parent=1 // pred_fallthru
      _
    %1397 = vsyncpa [#allocation4], 1
    %1398 = vsyncpa [#allocation6], 1

</llo_original>
